<compile_context>
chip_gen: v7x
topology: tpu7x:2x2x1
jax: 0.10.0
libtpu: 0.0.40
codegen_flags: <defaults>
</compile_context>

<pallas_src>
import jax
import jax.numpy as jnp
from jax.experimental import pallas as pl
from jax.experimental.pallas import tpu as pltpu

IN_FEATURES = 28 * 28 * 3   # 2352
HIDDEN = (128, 32)
LANE = 128
SUBLANE = 8
MIB = 1024 * 1024


def _round_up(x, m):
    return (x + m - 1) // m * m


def _mlp_kernel(x_ref, w1_ref, b1_ref, w2_ref, b2_ref, w3_ref, b3_ref, o_ref):
    # x arrives as f32 from HBM; cast to the MXU dtype on the VPU right before
    # the layer-1 dot (free: huge VPU slot slack vs. the multi-us x DMA).
    x = x_ref[...].astype(w1_ref.dtype)
    # Layer 1: (TILE_B, 2352) @ (2352, 128) + (1, 128), ReLU  (f32 accumulate)
    h1 = jnp.dot(x, w1_ref[...], preferred_element_type=jnp.float32)
    h1 = jnp.maximum(h1 + b1_ref[...], 0.0)
    # Layer 2: (TILE_B, 128) @ (128, 32) + (1, 32), ReLU
    h2 = jnp.dot(h1.astype(w2_ref.dtype), w2_ref[...],
                 preferred_element_type=jnp.float32)
    h2 = jnp.maximum(h2 + b2_ref[...], 0.0)
    # Layer 3: (TILE_B, 32) @ (32, out_pad) + (1, out_pad)
    out = jnp.dot(h2.astype(w3_ref.dtype), w3_ref[...],
                  preferred_element_type=jnp.float32)
    o_ref[...] = (out + b3_ref[...]).astype(o_ref.dtype)


def prepare_params(params, *, use_bf16=True):
    """One-time weight prep, hoisted out of the forward path.

    Casts weights to the MXU dtype (bf16 by default) and pads the final layer
    to a multiple of 128 lanes so the kernel's output store is lane-dense.
    Returns (prepared_params, out_dim)."""
    w1, b1, w2, b2, w3, b3 = params
    out_dim = w3.shape[1]
    out_pad = _round_up(max(out_dim, LANE), LANE)
    w3p = jnp.zeros((w3.shape[0], out_pad), jnp.float32).at[:, :out_dim].set(
        w3.astype(jnp.float32))
    b3p = jnp.zeros((1, out_pad), jnp.float32).at[:, :out_dim].set(
        b3.astype(jnp.float32))
    mxu = jnp.bfloat16 if use_bf16 else jnp.float32
    prepped = (w1.astype(mxu), b1.astype(jnp.float32),
               w2.astype(mxu), b2.astype(jnp.float32),
               w3p.astype(mxu), b3p)
    return prepped, out_dim


def privacy_ff_forward(x_nchw, prepared, out_dim, *, tile_b=1024,
                       return_padded=False):
    """x_nchw: (B, 3, 28, 28) float32.  Returns (B, out_dim) float32
    (or the lane-padded (B8, 128k) slab if return_padded=True)."""
    w1c, b1c, w2c, b2c, w3c, b3c = prepared
    out_pad = w3c.shape[1]
    B = x_nchw.shape[0]

    # Flatten exactly like torch's x.view(B, -1) (row-major over C, H, W).
    # x stays f32 in HBM; the bf16 cast happens inside the kernel.
    x_flat = x_nchw.reshape(B, -1).astype(jnp.float32)
    assert x_flat.shape[1] == IN_FEATURES

    # Pad only to the 8-row sublane granule (<= 7 rows). Tile-alignment of the
    # batch is handled by Pallas' ragged last block (writeback masked), so no
    # full-array pad pass is needed when B isn't a multiple of the tile.
    b8 = _round_up(B, SUBLANE)
    if b8 != B:
        x_flat = jnp.pad(x_flat, ((0, b8 - B), (0, 0)))

    # Batch tile: multiple of 8, capped by b8; ensure >= 2 grid steps when the
    # batch allows so both v7x TensorCores get work (no-op on v5e/v6e).
    tb = max(SUBLANE, _round_up(min(tile_b, b8), SUBLANE))
    if b8 > SUBLANE and pl.cdiv(b8, tb) < 2:
        tb = max(SUBLANE, _round_up(pl.cdiv(b8, 2), SUBLANE))

    # Derive the scoped VMEM limit from the actual buffers (double-buffered x
    # and out tiles + resident weights); shrink the tile if it wouldn't fit.
    weight_bytes = 2 * sum(a.size * a.dtype.itemsize
                           for a in (w1c, b1c, w2c, b2c, w3c, b3c))

    def vmem_needed(t):
        return (2 * t * IN_FEATURES * 4      # double-buffered f32 x tile
                + 2 * t * out_pad * 4        # double-buffered f32 out tile
                + weight_bytes)

    VMEM_CAP = 56 * MIB                      # headroom under v7x's 64 MiB/TC
    while tb > SUBLANE and vmem_needed(tb) > VMEM_CAP:
        tb = max(SUBLANE, _round_up(tb // 2, SUBLANE))
    vmem_limit = int(min(VMEM_CAP, max(16 * MIB, vmem_needed(tb) + 4 * MIB)))

    grid = (pl.cdiv(b8, tb),)

    def resident(shape):
        # Constant index_map -> block stays VMEM-resident across grid steps.
        return pl.BlockSpec(shape, lambda i: (0,) * len(shape))

    flops = 2 * b8 * (IN_FEATURES * HIDDEN[0]
                      + HIDDEN[0] * HIDDEN[1]
                      + HIDDEN[1] * out_pad)
    bytes_accessed = (x_flat.size * 4
                      + weight_bytes // 2
                      + b8 * out_pad * 4)

    out = pl.pallas_call(
        _mlp_kernel,
        out_shape=jax.ShapeDtypeStruct((b8, out_pad), jnp.float32),
        grid_spec=pltpu.PrefetchScalarGridSpec(
            num_scalar_prefetch=0,
            grid=grid,
            in_specs=[
                pl.BlockSpec((tb, IN_FEATURES), lambda i: (i, 0)),
                resident(w1c.shape), resident(b1c.shape),
                resident(w2c.shape), resident(b2c.shape),
                resident(w3c.shape), resident(b3c.shape),
            ],
            out_specs=pl.BlockSpec((tb, out_pad), lambda i: (i, 0)),
        ),
        compiler_params=pltpu.CompilerParams(
            dimension_semantics=("parallel",),
            vmem_limit_bytes=vmem_limit,
        ),
        cost_estimate=pl.CostEstimate(
            flops=flops, transcendentals=0, bytes_accessed=bytes_accessed),
    )(x_flat, w1c, b1c, w2c, b2c, w3c, b3c)

    if return_padded:
        return out
    return out[:B, :out_dim]


def init_params(output_dim, key):
    """Deterministic synthetic weights, shapes matching the PyTorch module.

    torch Linear weight (out, in) -> stored here as (in, out); bias as (1, out)
    so it broadcasts over the batch inside the kernel.
    """
    k1, k2, k3, k4, k5, k6 = jax.random.split(key, 6)
    dims = [IN_FEATURES, HIDDEN[0], HIDDEN[1], output_dim]

    def lin(kw, kb, fan_in, fan_out):
        bound = 1.0 / jnp.sqrt(fan_in)
        w = jax.random.uniform(kw, (fan_in, fan_out), jnp.float32, -bound, bound)
        b = jax.random.uniform(kb, (1, fan_out), jnp.float32, -bound, bound)
        return w, b

    w1, b1 = lin(k1, k2, dims[0], dims[1])
    w2, b2 = lin(k3, k4, dims[1], dims[2])
    w3, b3 = lin(k5, k6, dims[2], dims[3])
    return (w1, b1, w2, b2, w3, b3)


def _reference(x_nchw, params):
    w1, b1, w2, b2, w3, b3 = params
    x = x_nchw.reshape(x_nchw.shape[0], -1)
    h1 = jnp.maximum(x @ w1 + b1, 0.0)
    h2 = jnp.maximum(h1 @ w2 + b2, 0.0)
    return h2 @ w3 + b3


if __name__ == "__main__":
    output_dim = 10

    key = jax.random.PRNGKey(0)
    k_x, k_x2, k_p = jax.random.split(key, 3)
    params = init_params(output_dim, k_p)

    # --- Test 1: small batch, single grid step, f32 path (tight tolerance) ---
    prepped_f32, odim = prepare_params(params, use_bf16=False)
    x = jax.random.normal(k_x, (2, 3, 28, 28), jnp.float32)
    out_f32 = privacy_ff_forward(x, prepped_f32, odim)
    jax.block_until_ready(out_f32)
    ref = _reference(x, params)
    assert out_f32.shape == (2, output_dim)
    assert jnp.allclose(out_f32, ref, atol=1e-4, rtol=1e-4)

    # --- Test 2: batch not sublane/tile aligned, multi-step grid, bf16 MXU ---
    prepped_bf16, odim = prepare_params(params, use_bf16=True)
    x2 = jax.random.normal(k_x2, (20, 3, 28, 28), jnp.float32)
    out_bf16 = privacy_ff_forward(x2, prepped_bf16, odim, tile_b=16)
    jax.block_until_ready(out_bf16)
    ref2 = _reference(x2, params)
    assert out_bf16.shape == (20, output_dim)
    assert jnp.allclose(out_bf16, ref2, atol=3e-2, rtol=3e-2)

    print("KERNEL_OK")
</pallas_src>

<mosaic_0001>
module attributes {stable_mosaic.version = 11 : i64} {
  func.func @_mlp_kernel(%arg0: i32, %arg1: memref<8x2352xf32, #tpu.memory_space<vmem>>, %arg2: memref<2352x128xf32, #tpu.memory_space<vmem>>, %arg3: memref<1x128xf32, #tpu.memory_space<vmem>>, %arg4: memref<128x32xf32, #tpu.memory_space<vmem>>, %arg5: memref<1x32xf32, #tpu.memory_space<vmem>>, %arg6: memref<32x128xf32, #tpu.memory_space<vmem>>, %arg7: memref<1x128xf32, #tpu.memory_space<vmem>>, %arg8: memref<8x128xf32, #tpu.memory_space<vmem>>) attributes {dimension_semantics = [#tpu.dimension_semantics<parallel>], iteration_bounds = array<i64: 1>, scalar_prefetch = 0 : i64, scratch_operands = 0 : i64, tpu.core_type = #tpu.core_type<tc>, window_params = [{transform_indices = @transform_0, window_bounds = array<i64: 8, 2352>}, {pipeline_mode = #tpu.pipeline_mode<synchronous>, transform_indices = @transform_1, window_bounds = array<i64: 2352, 128>}, {pipeline_mode = #tpu.pipeline_mode<synchronous>, transform_indices = @transform_2, window_bounds = array<i64: 1, 128>}, {pipeline_mode = #tpu.pipeline_mode<synchronous>, transform_indices = @transform_3, window_bounds = array<i64: 128, 32>}, {pipeline_mode = #tpu.pipeline_mode<synchronous>, transform_indices = @transform_4, window_bounds = array<i64: 1, 32>}, {pipeline_mode = #tpu.pipeline_mode<synchronous>, transform_indices = @transform_5, window_bounds = array<i64: 32, 128>}, {pipeline_mode = #tpu.pipeline_mode<synchronous>, transform_indices = @transform_6, window_bounds = array<i64: 1, 128>}, {transform_indices = @transform_7, window_bounds = array<i64: 8, 128>}]} {
    %c0 = arith.constant 0 : index
    %c0_0 = arith.constant 0 : index
    %0 = vector.load %arg1[%c0, %c0_0] : memref<8x2352xf32, #tpu.memory_space<vmem>>, vector<8x2352xf32>
    %c0_1 = arith.constant 0 : index
    %c0_2 = arith.constant 0 : index
    %1 = vector.load %arg2[%c0_1, %c0_2] : memref<2352x128xf32, #tpu.memory_space<vmem>>, vector<2352x128xf32>
    %cst = arith.constant dense<0.000000e+00> : vector<8x128xf32>
    %2 = tpu.matmul %0, %1, %cst {dimension_numbers = #tpu.dot_dimension_numbers<[1], [0], [0], [1], [0, 0, 1, 1], [], []>} : vector<8x2352xf32>, vector<2352x128xf32>, vector<8x128xf32> -> vector<8x128xf32>
    %c0_3 = arith.constant 0 : index
    %c0_4 = arith.constant 0 : index
    %3 = vector.load %arg3[%c0_3, %c0_4] : memref<1x128xf32, #tpu.memory_space<vmem>>, vector<1x128xf32>
    %4 = vector.broadcast %3 : vector<1x128xf32> to vector<8x128xf32>
    %5 = arith.addf %2, %4 : vector<8x128xf32>
    %cst_5 = arith.constant 0.000000e+00 : f32
    %6 = vector.broadcast %cst_5 : f32 to vector<8x128xf32>
    %7 = arith.maximumf %5, %6 : vector<8x128xf32>
    %c0_6 = arith.constant 0 : index
    %c0_7 = arith.constant 0 : index
    %8 = vector.load %arg4[%c0_6, %c0_7] : memref<128x32xf32, #tpu.memory_space<vmem>>, vector<128x32xf32>
    %cst_8 = arith.constant dense<0.000000e+00> : vector<8x32xf32>
    %9 = tpu.matmul %7, %8, %cst_8 {dimension_numbers = #tpu.dot_dimension_numbers<[1], [0], [0], [1], [0, 0, 1, 1], [], []>} : vector<8x128xf32>, vector<128x32xf32>, vector<8x32xf32> -> vector<8x32xf32>
    %c0_9 = arith.constant 0 : index
    %c0_10 = arith.constant 0 : index
    %10 = vector.load %arg5[%c0_9, %c0_10] : memref<1x32xf32, #tpu.memory_space<vmem>>, vector<1x32xf32>
    %11 = vector.broadcast %10 : vector<1x32xf32> to vector<8x32xf32>
    %12 = arith.addf %9, %11 : vector<8x32xf32>
    %cst_11 = arith.constant 0.000000e+00 : f32
    %13 = vector.broadcast %cst_11 : f32 to vector<8x32xf32>
    %14 = arith.maximumf %12, %13 : vector<8x32xf32>
    %c0_12 = arith.constant 0 : index
    %c0_13 = arith.constant 0 : index
    %15 = vector.load %arg6[%c0_12, %c0_13] : memref<32x128xf32, #tpu.memory_space<vmem>>, vector<32x128xf32>
    %cst_14 = arith.constant dense<0.000000e+00> : vector<8x128xf32>
    %16 = tpu.matmul %14, %15, %cst_14 {dimension_numbers = #tpu.dot_dimension_numbers<[1], [0], [0], [1], [0, 0, 1, 1], [], []>} : vector<8x32xf32>, vector<32x128xf32>, vector<8x128xf32> -> vector<8x128xf32>
    %c0_15 = arith.constant 0 : index
    %c0_16 = arith.constant 0 : index
    %17 = vector.load %arg7[%c0_15, %c0_16] : memref<1x128xf32, #tpu.memory_space<vmem>>, vector<1x128xf32>
    %18 = vector.broadcast %17 : vector<1x128xf32> to vector<8x128xf32>
    %19 = arith.addf %16, %18 : vector<8x128xf32>
    %c0_17 = arith.constant 0 : index
    %c0_18 = arith.constant 0 : index
    %20 = vector.load %arg8[%c0_17, %c0_18] : memref<8x128xf32, #tpu.memory_space<vmem>>, vector<8x128xf32>
    tpu.vector_store %arg8[%c0_17, %c0_18], %19 {strides = array<i32>} : memref<8x128xf32, #tpu.memory_space<vmem>>, vector<8x128xf32>,
    return
  }
  func.func @transform_0(%arg0: i32) -> (i32, i32) {
    %c0_i32 = arith.constant 0 : i32
    %c0_i32_0 = arith.constant 0 : i32
    return %arg0, %c0_i32 : i32, i32
  }
  func.func @transform_1(%arg0: i32) -> (i32, i32) {
    %c0_i32 = arith.constant 0 : i32
    %c0_i32_0 = arith.constant 0 : i32
    %c0_i32_1 = arith.constant 0 : i32
    return %c0_i32, %c0_i32_0 : i32, i32
  }
  func.func @transform_2(%arg0: i32) -> (i32, i32) {
    %c0_i32 = arith.constant 0 : i32
    %c0_i32_0 = arith.constant 0 : i32
    %c0_i32_1 = arith.constant 0 : i32
    return %c0_i32, %c0_i32_0 : i32, i32
  }
  func.func @transform_3(%arg0: i32) -> (i32, i32) {
    %c0_i32 = arith.constant 0 : i32
    %c0_i32_0 = arith.constant 0 : i32
    %c0_i32_1 = arith.constant 0 : i32
    return %c0_i32, %c0_i32_0 : i32, i32
  }
  func.func @transform_4(%arg0: i32) -> (i32, i32) {
    %c0_i32 = arith.constant 0 : i32
    %c0_i32_0 = arith.constant 0 : i32
    %c0_i32_1 = arith.constant 0 : i32
    return %c0_i32, %c0_i32_0 : i32, i32
  }
  func.func @transform_5(%arg0: i32) -> (i32, i32) {
    %c0_i32 = arith.constant 0 : i32
    %c0_i32_0 = arith.constant 0 : i32
    %c0_i32_1 = arith.constant 0 : i32
    return %c0_i32, %c0_i32_0 : i32, i32
  }
  func.func @transform_6(%arg0: i32) -> (i32, i32) {
    %c0_i32 = arith.constant 0 : i32
    %c0_i32_0 = arith.constant 0 : i32
    %c0_i32_1 = arith.constant 0 : i32
    return %c0_i32, %c0_i32_0 : i32, i32
  }
  func.func @transform_7(%arg0: i32) -> (i32, i32) {
    %c0_i32 = arith.constant 0 : i32
    %c0_i32_0 = arith.constant 0 : i32
    return %arg0, %c0_i32 : i32, i32
  }
}

</mosaic_0001>

<llo_original>
// kernel: tpu_custom_call.1
$region0: #{tpu_custom_call.1}
  #allocation0 [shape = 'u32[]', space=smem, size = 0x4, offset = 0x4, fixed_abs, tag = 'smem constant byte address 0x4 - core index']
  #allocation1 [shape = 'u32[144,128]{1,0:T(1,128)}', space=vmem, size = 0x12000, scoped, tag = 'internal scratch']
  %s0 = inlined_call_operand.hbm [shape: f32[8,2352], index: 0, kind: input, shape index: {}]
  %s1 = inlined_call_operand.hbm [shape: f32[2352,128], index: 1, kind: input, shape index: {}]
  %s2 = inlined_call_operand.hbm [shape: f32[1,128], index: 2, kind: input, shape index: {}]
  %s3 = inlined_call_operand.vmem [shape: f32[128,32], index: 3, kind: input, shape index: {}]
  %s4 = inlined_call_operand.hbm [shape: f32[1,32], index: 4, kind: input, shape index: {}]
  %s5 = inlined_call_operand.hbm [shape: f32[32,128], index: 5, kind: input, shape index: {}]
  %s6 = inlined_call_operand.hbm [shape: f32[1,128], index: 6, kind: input, shape index: {}]
  %s7 = inlined_call_operand.hbm [shape: f32[8,128], index: 7, kind: output, shape index: {}]
  %s8 = sld [smem:[#allocation0]]
  $region62: #{tpu_custom_call.1} parent=0
    _
  %s10 = ssub.s32 1, %s8
  %s11 = scalar_select 0, %s10, %s8
  $region1: #{tpu_custom_call.1} parent=0
    #allocation2 [shape = 'u8[77824]{0}', space=vmem, size = 0x13000, scoped, tag = 'input window, operand 0, single buffered']
    #allocation3 [shape = 's32[1]{0}', space=sflag, size = 0x4, scoped, tag = 'scoped memory for tpu_custom_call.1']
    #allocation4 [shape = 's32[1]{0}', space=sflag, size = 0x4, scoped, tag = 'scoped memory for tpu_custom_call.1']
    #allocation5 [shape = 'u8[1204224]{0}', space=vmem, size = 0x126000, scoped, tag = 'input window, operand 1, single buffered']
    #allocation6 [shape = 's32[1]{0}', space=sflag, size = 0x4, scoped, tag = 'scoped memory for tpu_custom_call.1']
    #allocation7 [shape = 'u8[512]{0}', space=vmem, size = 0x400, scoped, tag = 'input window, operand 2, single buffered']
    #allocation8 [shape = 'u8[512]{0}', space=vmem, size = 0x400, scoped, tag = 'input window, operand 4, single buffered']
    #allocation9 [shape = 's32[1]{0}', space=sflag, size = 0x4, scoped, tag = 'scoped memory for tpu_custom_call.1']
    #allocation10 [shape = 'u8[16384]{0}', space=vmem, size = 0x4000, scoped, tag = 'input window, operand 5, single buffered']
    #allocation11 [shape = 'u8[512]{0}', space=vmem, size = 0x400, scoped, tag = 'input window, operand 6, single buffered']
    #allocation12 [shape = 's32[1]{0}', space=sflag, size = 0x4, scoped, tag = 'scoped memory for tpu_custom_call.1']
    #allocation13 [shape = 'u8[4096]{0}', space=vmem, size = 0x1000, scoped, tag = 'output window, operand 0, single buffered']
    %12 = vsyncpa [#allocation3], 0
    %13 = vsyncpa [#allocation6], 0
    %14 = vsyncpa [#allocation9], 0
    %15 = vsyncpa [#allocation12], 0
    %16 = vsyncpa [#allocation4], 0
    // Predicated region
    $region2: #{tpu_custom_call.1} parent=1 // pred_check
      _
    $region3: #{tpu_custom_call.1} parent=1 // pred_check_branch
      %18 = sbr.rel (0) target = $region5
    $region4: #{tpu_custom_call.1} parent=1 // pred_region
      %s20 = ssub.s32 2432, 2432
      %21 = vsyncadd [#allocation3], %s20
      %s23 = sshll.u32 [#allocation2], 4
      %s24 = int_to_ptr.vmem [resolvable:$true] %s23
      %26 = dma.hbm_to_vmem [thread:$0]  %s0, 2432, %s24, [#allocation3]
    $region5: #{tpu_custom_call.1} parent=1 // pred_fallthru
      _
    // Predicated region
    $region6: #{tpu_custom_call.1} parent=1 // pred_check
      _
    $region7: #{tpu_custom_call.1} parent=1 // pred_check_branch
      %28 = sbr.rel (0) target = $region9
    $region8: #{tpu_custom_call.1} parent=1 // pred_region
      %s30 = ssub.s32 37632, 37632
      %31 = vsyncadd [#allocation6], %s30
      %s32 = sshll.u32 [#allocation5], 4
      %s33 = int_to_ptr.vmem [resolvable:$true] %s32
      %38 = dma.hbm_to_vmem [thread:$0]  %s1, 37632, %s33, [#allocation6], 128, 128, 8
    $region9: #{tpu_custom_call.1} parent=1 // pred_fallthru
      _
    // Predicated region
    $region10: #{tpu_custom_call.1} parent=1 // pred_check
      _
    $region11: #{tpu_custom_call.1} parent=1 // pred_check_branch
      %40 = sbr.rel (0) target = $region13
    $region12: #{tpu_custom_call.1} parent=1 // pred_region
      %s42 = ssub.s32 16, 16
      %43 = vsyncadd [#allocation6], %s42
      %s45 = sshll.u32 [#allocation7], 4
      %s46 = int_to_ptr.vmem [resolvable:$true] %s45
      %48 = dma.hbm_to_vmem [thread:$0]  %s2, 16, %s46, [#allocation6]
    $region13: #{tpu_custom_call.1} parent=1 // pred_fallthru
      _
    // Predicated region
    $region14: #{tpu_custom_call.1} parent=1 // pred_check
      _
    $region15: #{tpu_custom_call.1} parent=1 // pred_check_branch
      %50 = sbr.rel (0) target = $region17
    $region16: #{tpu_custom_call.1} parent=1 // pred_region
      _
    $region17: #{tpu_custom_call.1} parent=1 // pred_fallthru
      _
    // Predicated region
    $region18: #{tpu_custom_call.1} parent=1 // pred_check
      _
    $region19: #{tpu_custom_call.1} parent=1 // pred_check_branch
      %52 = sbr.rel (0) target = $region21
    $region20: #{tpu_custom_call.1} parent=1 // pred_region
      %s54 = ssub.s32 16, 16
      %55 = vsyncadd [#allocation9], %s54
      %s57 = sshll.u32 [#allocation8], 4
      %s58 = int_to_ptr.vmem [resolvable:$true] %s57
      %60 = dma.hbm_to_vmem [thread:$0]  %s4, 16, %s58, [#allocation9]
    $region21: #{tpu_custom_call.1} parent=1 // pred_fallthru
      _
    // Predicated region
    $region22: #{tpu_custom_call.1} parent=1 // pred_check
      _
    $region23: #{tpu_custom_call.1} parent=1 // pred_check_branch
      %62 = sbr.rel (0) target = $region25
    $region24: #{tpu_custom_call.1} parent=1 // pred_region
      %s64 = ssub.s32 512, 512
      %65 = vsyncadd [#allocation9], %s64
      %s66 = sshll.u32 [#allocation10], 4
      %s67 = int_to_ptr.vmem [resolvable:$true] %s66
      %72 = dma.hbm_to_vmem [thread:$0]  %s5, 512, %s67, [#allocation9], 128, 128, 8
    $region25: #{tpu_custom_call.1} parent=1 // pred_fallthru
      _
    // Predicated region
    $region26: #{tpu_custom_call.1} parent=1 // pred_check
      _
    $region27: #{tpu_custom_call.1} parent=1 // pred_check_branch
      %74 = sbr.rel (0) target = $region29
    $region28: #{tpu_custom_call.1} parent=1 // pred_region
      %s76 = ssub.s32 16, 16
      %77 = vsyncadd [#allocation12], %s76
      %s79 = sshll.u32 [#allocation11], 4
      %s80 = int_to_ptr.vmem [resolvable:$true] %s79
      %82 = dma.hbm_to_vmem [thread:$0]  %s6, 16, %s80, [#allocation12]
    $region29: #{tpu_custom_call.1} parent=1 // pred_fallthru
      _
    // Predicated region
    $region30: #{tpu_custom_call.1} parent=1 // pred_check
      _
    $region31: #{tpu_custom_call.1} parent=1 // pred_check_branch
      %84 = sbr.rel (0) target = $region33
    $region32: #{tpu_custom_call.1} parent=1 // pred_region
      %85 = dma.done [#allocation3], 2432
    $region33: #{tpu_custom_call.1} parent=1 // pred_fallthru
      _
    // Predicated region
    $region34: #{tpu_custom_call.1} parent=1 // pred_check
      _
    $region35: #{tpu_custom_call.1} parent=1 // pred_check_branch
      %87 = sbr.rel (0) target = $region37
    $region36: #{tpu_custom_call.1} parent=1 // pred_region
      %88 = dma.done [#allocation6], 37632
    $region37: #{tpu_custom_call.1} parent=1 // pred_fallthru
      _
    // Predicated region
    $region38: #{tpu_custom_call.1} parent=1 // pred_check
      _
    $region39: #{tpu_custom_call.1} parent=1 // pred_check_branch
      %90 = sbr.rel (0) target = $region41
    $region40: #{tpu_custom_call.1} parent=1 // pred_region
      %91 = dma.done [#allocation6], 16
    $region41: #{tpu_custom_call.1} parent=1 // pred_fallthru
      _
    // Predicated region
    $region42: #{tpu_custom_call.1} parent=1 // pred_check
      _
    $region43: #{tpu_custom_call.1} parent=1 // pred_check_branch
      %93 = sbr.rel (0) target = $region45
    $region44: #{tpu_custom_call.1} parent=1 // pred_region
      %94 = dma.done [#allocation9], 16
    $region45: #{tpu_custom_call.1} parent=1 // pred_fallthru
      _
    // Predicated region
    $region46: #{tpu_custom_call.1} parent=1 // pred_check
      _
    $region47: #{tpu_custom_call.1} parent=1 // pred_check_branch
      %96 = sbr.rel (0) target = $region49
    $region48: #{tpu_custom_call.1} parent=1 // pred_region
      %97 = dma.done [#allocation9], 512
    $region49: #{tpu_custom_call.1} parent=1 // pred_fallthru
      _
    // Predicated region
    $region50: #{tpu_custom_call.1} parent=1 // pred_check
      _
    $region51: #{tpu_custom_call.1} parent=1 // pred_check_branch
      %99 = sbr.rel (0) target = $region53
    $region52: #{tpu_custom_call.1} parent=1 // pred_region
      %100 = dma.done [#allocation12], 16
    $region53: #{tpu_custom_call.1} parent=1 // pred_fallthru
      _
    %v101 = vld [vmem:[#allocation2] sm:$0xff]
    %v102 = vld [vmem:[#allocation2 + $0x8] sm:$0xff]
    %v103 = vld [vmem:[#allocation2 + $0x10] sm:$0xff]
    %v104 = vld [vmem:[#allocation2 + $0x18] sm:$0xff]
    %v105 = vld [vmem:[#allocation2 + $0x20] sm:$0xff]
    %v106 = vld [vmem:[#allocation2 + $0x28] sm:$0xff]
    %v107 = vld [vmem:[#allocation2 + $0x30] sm:$0xff]
    %v108 = vld [vmem:[#allocation2 + $0x38] sm:$0xff]
    %v109 = vld [vmem:[#allocation2 + $0x40] sm:$0xff]
    %v110 = vld [vmem:[#allocation2 + $0x48] sm:$0xff]
    %v111 = vld [vmem:[#allocation2 + $0x50] sm:$0xff]
    %v112 = vld [vmem:[#allocation2 + $0x58] sm:$0xff]
    %v113 = vld [vmem:[#allocation2 + $0x60] sm:$0xff]
    %v114 = vld [vmem:[#allocation2 + $0x68] sm:$0xff]
    %v115 = vld [vmem:[#allocation2 + $0x70] sm:$0xff]
    %v116 = vld [vmem:[#allocation2 + $0x78] sm:$0xff]
    %v117 = vld [vmem:[#allocation2 + $0x80] sm:$0xff]
    %v118 = vld [vmem:[#allocation2 + $0x88] sm:$0xff]
    %v119 = vld [vmem:[#allocation2 + $0x90] sm:$0xff]
    %v120 = vld [vmem:[#allocation5] sm:$0xff]
    %v121 = vld [vmem:[#allocation5 + $0x8] sm:$0xff]
    %v122 = vld [vmem:[#allocation5 + $0x10] sm:$0xff]
    %v123 = vld [vmem:[#allocation5 + $0x18] sm:$0xff]
    %v124 = vld [vmem:[#allocation5 + $0x20] sm:$0xff]
    %v125 = vld [vmem:[#allocation5 + $0x28] sm:$0xff]
    %v126 = vld [vmem:[#allocation5 + $0x30] sm:$0xff]
    %v127 = vld [vmem:[#allocation5 + $0x38] sm:$0xff]
    %v128 = vld [vmem:[#allocation5 + $0x40] sm:$0xff]
    %v129 = vld [vmem:[#allocation5 + $0x48] sm:$0xff]
    %v130 = vld [vmem:[#allocation5 + $0x50] sm:$0xff]
    %v131 = vld [vmem:[#allocation5 + $0x58] sm:$0xff]
    %v132 = vld [vmem:[#allocation5 + $0x60] sm:$0xff]
    %v133 = vld [vmem:[#allocation5 + $0x68] sm:$0xff]
    %v134 = vld [vmem:[#allocation5 + $0x70] sm:$0xff]
    %v135 = vld [vmem:[#allocation5 + $0x78] sm:$0xff]
    %v136 = vld [vmem:[#allocation5 + $0x80] sm:$0xff]
    %v137 = vld [vmem:[#allocation5 + $0x88] sm:$0xff]
    %v138 = vld [vmem:[#allocation5 + $0x90] sm:$0xff]
    %v139 = vld [vmem:[#allocation5 + $0x98] sm:$0xff]
    %v140 = vld [vmem:[#allocation5 + $0xa0] sm:$0xff]
    %v141 = vld [vmem:[#allocation5 + $0xa8] sm:$0xff]
    %v142 = vld [vmem:[#allocation5 + $0xb0] sm:$0xff]
    %v143 = vld [vmem:[#allocation5 + $0xb8] sm:$0xff]
    %v144 = vld [vmem:[#allocation5 + $0xc0] sm:$0xff]
    %v145 = vld [vmem:[#allocation5 + $0xc8] sm:$0xff]
    %v146 = vld [vmem:[#allocation5 + $0xd0] sm:$0xff]
    %v147 = vld [vmem:[#allocation5 + $0xd8] sm:$0xff]
    %v148 = vld [vmem:[#allocation5 + $0xe0] sm:$0xff]
    %v149 = vld [vmem:[#allocation5 + $0xe8] sm:$0xff]
    %v150 = vld [vmem:[#allocation5 + $0xf0] sm:$0xff]
    %v151 = vld [vmem:[#allocation5 + $0xf8] sm:$0xff]
    %v152 = vld [vmem:[#allocation5 + $0x100] sm:$0xff]
    %v153 = vld [vmem:[#allocation5 + $0x108] sm:$0xff]
    %v154 = vld [vmem:[#allocation5 + $0x110] sm:$0xff]
    %v155 = vld [vmem:[#allocation5 + $0x118] sm:$0xff]
    %v156 = vld [vmem:[#allocation5 + $0x120] sm:$0xff]
    %v157 = vld [vmem:[#allocation5 + $0x128] sm:$0xff]
    %v158 = vld [vmem:[#allocation5 + $0x130] sm:$0xff]
    %v159 = vld [vmem:[#allocation5 + $0x138] sm:$0xff]
    %v160 = vld [vmem:[#allocation5 + $0x140] sm:$0xff]
    %v161 = vld [vmem:[#allocation5 + $0x148] sm:$0xff]
    %v162 = vld [vmem:[#allocation5 + $0x150] sm:$0xff]
    %v163 = vld [vmem:[#allocation5 + $0x158] sm:$0xff]
    %v164 = vld [vmem:[#allocation5 + $0x160] sm:$0xff]
    %v165 = vld [vmem:[#allocation5 + $0x168] sm:$0xff]
    %v166 = vld [vmem:[#allocation5 + $0x170] sm:$0xff]
    %v167 = vld [vmem:[#allocation5 + $0x178] sm:$0xff]
    %v168 = vld [vmem:[#allocation5 + $0x180] sm:$0xff]
    %v169 = vld [vmem:[#allocation5 + $0x188] sm:$0xff]
    %v170 = vld [vmem:[#allocation5 + $0x190] sm:$0xff]
    %v171 = vld [vmem:[#allocation5 + $0x198] sm:$0xff]
    %v172 = vld [vmem:[#allocation5 + $0x1a0] sm:$0xff]
    %v173 = vld [vmem:[#allocation5 + $0x1a8] sm:$0xff]
    %v174 = vld [vmem:[#allocation5 + $0x1b0] sm:$0xff]
    %v175 = vld [vmem:[#allocation5 + $0x1b8] sm:$0xff]
    %v176 = vld [vmem:[#allocation5 + $0x1c0] sm:$0xff]
    %v177 = vld [vmem:[#allocation5 + $0x1c8] sm:$0xff]
    %v178 = vld [vmem:[#allocation5 + $0x1d0] sm:$0xff]
    %v179 = vld [vmem:[#allocation5 + $0x1d8] sm:$0xff]
    %v180 = vld [vmem:[#allocation5 + $0x1e0] sm:$0xff]
    %v181 = vld [vmem:[#allocation5 + $0x1e8] sm:$0xff]
    %v182 = vld [vmem:[#allocation5 + $0x1f0] sm:$0xff]
    %v183 = vld [vmem:[#allocation5 + $0x1f8] sm:$0xff]
    %v184 = vld [vmem:[#allocation5 + $0x200] sm:$0xff]
    %v185 = vld [vmem:[#allocation5 + $0x208] sm:$0xff]
    %v186 = vld [vmem:[#allocation5 + $0x210] sm:$0xff]
    %v187 = vld [vmem:[#allocation5 + $0x218] sm:$0xff]
    %v188 = vld [vmem:[#allocation5 + $0x220] sm:$0xff]
    %v189 = vld [vmem:[#allocation5 + $0x228] sm:$0xff]
    %v190 = vld [vmem:[#allocation5 + $0x230] sm:$0xff]
    %v191 = vld [vmem:[#allocation5 + $0x238] sm:$0xff]
    %v192 = vld [vmem:[#allocation5 + $0x240] sm:$0xff]
    %v193 = vld [vmem:[#allocation5 + $0x248] sm:$0xff]
    %v194 = vld [vmem:[#allocation5 + $0x250] sm:$0xff]
    %v195 = vld [vmem:[#allocation5 + $0x258] sm:$0xff]
    %v196 = vld [vmem:[#allocation5 + $0x260] sm:$0xff]
    %v197 = vld [vmem:[#allocation5 + $0x268] sm:$0xff]
    %v198 = vld [vmem:[#allocation5 + $0x270] sm:$0xff]
    %v199 = vld [vmem:[#allocation5 + $0x278] sm:$0xff]
    %v200 = vld [vmem:[#allocation5 + $0x280] sm:$0xff]
    %v201 = vld [vmem:[#allocation5 + $0x288] sm:$0xff]
    %v202 = vld [vmem:[#allocation5 + $0x290] sm:$0xff]
    %v203 = vld [vmem:[#allocation5 + $0x298] sm:$0xff]
    %v204 = vld [vmem:[#allocation5 + $0x2a0] sm:$0xff]
    %v205 = vld [vmem:[#allocation5 + $0x2a8] sm:$0xff]
    %v206 = vld [vmem:[#allocation5 + $0x2b0] sm:$0xff]
    %v207 = vld [vmem:[#allocation5 + $0x2b8] sm:$0xff]
    %v208 = vld [vmem:[#allocation5 + $0x2c0] sm:$0xff]
    %v209 = vld [vmem:[#allocation5 + $0x2c8] sm:$0xff]
    %v210 = vld [vmem:[#allocation5 + $0x2d0] sm:$0xff]
    %v211 = vld [vmem:[#allocation5 + $0x2d8] sm:$0xff]
    %v212 = vld [vmem:[#allocation5 + $0x2e0] sm:$0xff]
    %v213 = vld [vmem:[#allocation5 + $0x2e8] sm:$0xff]
    %v214 = vld [vmem:[#allocation5 + $0x2f0] sm:$0xff]
    %v215 = vld [vmem:[#allocation5 + $0x2f8] sm:$0xff]
    %v216 = vld [vmem:[#allocation5 + $0x300] sm:$0xff]
    %v217 = vld [vmem:[#allocation5 + $0x308] sm:$0xff]
    %v218 = vld [vmem:[#allocation5 + $0x310] sm:$0xff]
    %v219 = vld [vmem:[#allocation5 + $0x318] sm:$0xff]
    %v220 = vld [vmem:[#allocation5 + $0x320] sm:$0xff]
    %v221 = vld [vmem:[#allocation5 + $0x328] sm:$0xff]
    %v222 = vld [vmem:[#allocation5 + $0x330] sm:$0xff]
    %v223 = vld [vmem:[#allocation5 + $0x338] sm:$0xff]
    %v224 = vld [vmem:[#allocation5 + $0x340] sm:$0xff]
    %v225 = vld [vmem:[#allocation5 + $0x348] sm:$0xff]
    %v226 = vld [vmem:[#allocation5 + $0x350] sm:$0xff]
    %v227 = vld [vmem:[#allocation5 + $0x358] sm:$0xff]
    %v228 = vld [vmem:[#allocation5 + $0x360] sm:$0xff]
    %v229 = vld [vmem:[#allocation5 + $0x368] sm:$0xff]
    %v230 = vld [vmem:[#allocation5 + $0x370] sm:$0xff]
    %v231 = vld [vmem:[#allocation5 + $0x378] sm:$0xff]
    %v232 = vld [vmem:[#allocation5 + $0x380] sm:$0xff]
    %v233 = vld [vmem:[#allocation5 + $0x388] sm:$0xff]
    %v234 = vld [vmem:[#allocation5 + $0x390] sm:$0xff]
    %v235 = vld [vmem:[#allocation5 + $0x398] sm:$0xff]
    %v236 = vld [vmem:[#allocation5 + $0x3a0] sm:$0xff]
    %v237 = vld [vmem:[#allocation5 + $0x3a8] sm:$0xff]
    %v238 = vld [vmem:[#allocation5 + $0x3b0] sm:$0xff]
    %v239 = vld [vmem:[#allocation5 + $0x3b8] sm:$0xff]
    %v240 = vld [vmem:[#allocation5 + $0x3c0] sm:$0xff]
    %v241 = vld [vmem:[#allocation5 + $0x3c8] sm:$0xff]
    %v242 = vld [vmem:[#allocation5 + $0x3d0] sm:$0xff]
    %v243 = vld [vmem:[#allocation5 + $0x3d8] sm:$0xff]
    %v244 = vld [vmem:[#allocation5 + $0x3e0] sm:$0xff]
    %v245 = vld [vmem:[#allocation5 + $0x3e8] sm:$0xff]
    %v246 = vld [vmem:[#allocation5 + $0x3f0] sm:$0xff]
    %v247 = vld [vmem:[#allocation5 + $0x3f8] sm:$0xff]
    %v248 = vld [vmem:[#allocation5 + $0x400] sm:$0xff]
    %v249 = vld [vmem:[#allocation5 + $0x408] sm:$0xff]
    %v250 = vld [vmem:[#allocation5 + $0x410] sm:$0xff]
    %v251 = vld [vmem:[#allocation5 + $0x418] sm:$0xff]
    %v252 = vld [vmem:[#allocation5 + $0x420] sm:$0xff]
    %v253 = vld [vmem:[#allocation5 + $0x428] sm:$0xff]
    %v254 = vld [vmem:[#allocation5 + $0x430] sm:$0xff]
    %v255 = vld [vmem:[#allocation5 + $0x438] sm:$0xff]
    %v256 = vld [vmem:[#allocation5 + $0x440] sm:$0xff]
    %v257 = vld [vmem:[#allocation5 + $0x448] sm:$0xff]
    %v258 = vld [vmem:[#allocation5 + $0x450] sm:$0xff]
    %v259 = vld [vmem:[#allocation5 + $0x458] sm:$0xff]
    %v260 = vld [vmem:[#allocation5 + $0x460] sm:$0xff]
    %v261 = vld [vmem:[#allocation5 + $0x468] sm:$0xff]
    %v262 = vld [vmem:[#allocation5 + $0x470] sm:$0xff]
    %v263 = vld [vmem:[#allocation5 + $0x478] sm:$0xff]
    %v264 = vld [vmem:[#allocation5 + $0x480] sm:$0xff]
    %v265 = vld [vmem:[#allocation5 + $0x488] sm:$0xff]
    %v266 = vld [vmem:[#allocation5 + $0x490] sm:$0xff]
    %v267 = vld [vmem:[#allocation5 + $0x498] sm:$0xff]
    %v268 = vld [vmem:[#allocation5 + $0x4a0] sm:$0xff]
    %v269 = vld [vmem:[#allocation5 + $0x4a8] sm:$0xff]
    %v270 = vld [vmem:[#allocation5 + $0x4b0] sm:$0xff]
    %v271 = vld [vmem:[#allocation5 + $0x4b8] sm:$0xff]
    %v272 = vld [vmem:[#allocation5 + $0x4c0] sm:$0xff]
    %v273 = vld [vmem:[#allocation5 + $0x4c8] sm:$0xff]
    %v274 = vld [vmem:[#allocation5 + $0x4d0] sm:$0xff]
    %v275 = vld [vmem:[#allocation5 + $0x4d8] sm:$0xff]
    %v276 = vld [vmem:[#allocation5 + $0x4e0] sm:$0xff]
    %v277 = vld [vmem:[#allocation5 + $0x4e8] sm:$0xff]
    %v278 = vld [vmem:[#allocation5 + $0x4f0] sm:$0xff]
    %v279 = vld [vmem:[#allocation5 + $0x4f8] sm:$0xff]
    %v280 = vld [vmem:[#allocation5 + $0x500] sm:$0xff]
    %v281 = vld [vmem:[#allocation5 + $0x508] sm:$0xff]
    %v282 = vld [vmem:[#allocation5 + $0x510] sm:$0xff]
    %v283 = vld [vmem:[#allocation5 + $0x518] sm:$0xff]
    %v284 = vld [vmem:[#allocation5 + $0x520] sm:$0xff]
    %v285 = vld [vmem:[#allocation5 + $0x528] sm:$0xff]
    %v286 = vld [vmem:[#allocation5 + $0x530] sm:$0xff]
    %v287 = vld [vmem:[#allocation5 + $0x538] sm:$0xff]
    %v288 = vld [vmem:[#allocation5 + $0x540] sm:$0xff]
    %v289 = vld [vmem:[#allocation5 + $0x548] sm:$0xff]
    %v290 = vld [vmem:[#allocation5 + $0x550] sm:$0xff]
    %v291 = vld [vmem:[#allocation5 + $0x558] sm:$0xff]
    %v292 = vld [vmem:[#allocation5 + $0x560] sm:$0xff]
    %v293 = vld [vmem:[#allocation5 + $0x568] sm:$0xff]
    %v294 = vld [vmem:[#allocation5 + $0x570] sm:$0xff]
    %v295 = vld [vmem:[#allocation5 + $0x578] sm:$0xff]
    %v296 = vld [vmem:[#allocation5 + $0x580] sm:$0xff]
    %v297 = vld [vmem:[#allocation5 + $0x588] sm:$0xff]
    %v298 = vld [vmem:[#allocation5 + $0x590] sm:$0xff]
    %v299 = vld [vmem:[#allocation5 + $0x598] sm:$0xff]
    %v300 = vld [vmem:[#allocation5 + $0x5a0] sm:$0xff]
    %v301 = vld [vmem:[#allocation5 + $0x5a8] sm:$0xff]
    %v302 = vld [vmem:[#allocation5 + $0x5b0] sm:$0xff]
    %v303 = vld [vmem:[#allocation5 + $0x5b8] sm:$0xff]
    %v304 = vld [vmem:[#allocation5 + $0x5c0] sm:$0xff]
    %v305 = vld [vmem:[#allocation5 + $0x5c8] sm:$0xff]
    %v306 = vld [vmem:[#allocation5 + $0x5d0] sm:$0xff]
    %v307 = vld [vmem:[#allocation5 + $0x5d8] sm:$0xff]
    %v308 = vld [vmem:[#allocation5 + $0x5e0] sm:$0xff]
    %v309 = vld [vmem:[#allocation5 + $0x5e8] sm:$0xff]
    %v310 = vld [vmem:[#allocation5 + $0x5f0] sm:$0xff]
    %v311 = vld [vmem:[#allocation5 + $0x5f8] sm:$0xff]
    %v312 = vld [vmem:[#allocation5 + $0x600] sm:$0xff]
    %v313 = vld [vmem:[#allocation5 + $0x608] sm:$0xff]
    %v314 = vld [vmem:[#allocation5 + $0x610] sm:$0xff]
    %v315 = vld [vmem:[#allocation5 + $0x618] sm:$0xff]
    %v316 = vld [vmem:[#allocation5 + $0x620] sm:$0xff]
    %v317 = vld [vmem:[#allocation5 + $0x628] sm:$0xff]
    %v318 = vld [vmem:[#allocation5 + $0x630] sm:$0xff]
    %v319 = vld [vmem:[#allocation5 + $0x638] sm:$0xff]
    %v320 = vld [vmem:[#allocation5 + $0x640] sm:$0xff]
    %v321 = vld [vmem:[#allocation5 + $0x648] sm:$0xff]
    %v322 = vld [vmem:[#allocation5 + $0x650] sm:$0xff]
    %v323 = vld [vmem:[#allocation5 + $0x658] sm:$0xff]
    %v324 = vld [vmem:[#allocation5 + $0x660] sm:$0xff]
    %v325 = vld [vmem:[#allocation5 + $0x668] sm:$0xff]
    %v326 = vld [vmem:[#allocation5 + $0x670] sm:$0xff]
    %v327 = vld [vmem:[#allocation5 + $0x678] sm:$0xff]
    %v328 = vld [vmem:[#allocation5 + $0x680] sm:$0xff]
    %v329 = vld [vmem:[#allocation5 + $0x688] sm:$0xff]
    %v330 = vld [vmem:[#allocation5 + $0x690] sm:$0xff]
    %v331 = vld [vmem:[#allocation5 + $0x698] sm:$0xff]
    %v332 = vld [vmem:[#allocation5 + $0x6a0] sm:$0xff]
    %v333 = vld [vmem:[#allocation5 + $0x6a8] sm:$0xff]
    %v334 = vld [vmem:[#allocation5 + $0x6b0] sm:$0xff]
    %v335 = vld [vmem:[#allocation5 + $0x6b8] sm:$0xff]
    %v336 = vld [vmem:[#allocation5 + $0x6c0] sm:$0xff]
    %v337 = vld [vmem:[#allocation5 + $0x6c8] sm:$0xff]
    %v338 = vld [vmem:[#allocation5 + $0x6d0] sm:$0xff]
    %v339 = vld [vmem:[#allocation5 + $0x6d8] sm:$0xff]
    %v340 = vld [vmem:[#allocation5 + $0x6e0] sm:$0xff]
    %v341 = vld [vmem:[#allocation5 + $0x6e8] sm:$0xff]
    %v342 = vld [vmem:[#allocation5 + $0x6f0] sm:$0xff]
    %v343 = vld [vmem:[#allocation5 + $0x6f8] sm:$0xff]
    %v344 = vld [vmem:[#allocation5 + $0x700] sm:$0xff]
    %v345 = vld [vmem:[#allocation5 + $0x708] sm:$0xff]
    %v346 = vld [vmem:[#allocation5 + $0x710] sm:$0xff]
    %v347 = vld [vmem:[#allocation5 + $0x718] sm:$0xff]
    %v348 = vld [vmem:[#allocation5 + $0x720] sm:$0xff]
    %v349 = vld [vmem:[#allocation5 + $0x728] sm:$0xff]
    %v350 = vld [vmem:[#allocation5 + $0x730] sm:$0xff]
    %v351 = vld [vmem:[#allocation5 + $0x738] sm:$0xff]
    %v352 = vld [vmem:[#allocation5 + $0x740] sm:$0xff]
    %v353 = vld [vmem:[#allocation5 + $0x748] sm:$0xff]
    %v354 = vld [vmem:[#allocation5 + $0x750] sm:$0xff]
    %v355 = vld [vmem:[#allocation5 + $0x758] sm:$0xff]
    %v356 = vld [vmem:[#allocation5 + $0x760] sm:$0xff]
    %v357 = vld [vmem:[#allocation5 + $0x768] sm:$0xff]
    %v358 = vld [vmem:[#allocation5 + $0x770] sm:$0xff]
    %v359 = vld [vmem:[#allocation5 + $0x778] sm:$0xff]
    %v360 = vld [vmem:[#allocation5 + $0x780] sm:$0xff]
    %v361 = vld [vmem:[#allocation5 + $0x788] sm:$0xff]
    %v362 = vld [vmem:[#allocation5 + $0x790] sm:$0xff]
    %v363 = vld [vmem:[#allocation5 + $0x798] sm:$0xff]
    %v364 = vld [vmem:[#allocation5 + $0x7a0] sm:$0xff]
    %v365 = vld [vmem:[#allocation5 + $0x7a8] sm:$0xff]
    %v366 = vld [vmem:[#allocation5 + $0x7b0] sm:$0xff]
    %v367 = vld [vmem:[#allocation5 + $0x7b8] sm:$0xff]
    %v368 = vld [vmem:[#allocation5 + $0x7c0] sm:$0xff]
    %v369 = vld [vmem:[#allocation5 + $0x7c8] sm:$0xff]
    %v370 = vld [vmem:[#allocation5 + $0x7d0] sm:$0xff]
    %v371 = vld [vmem:[#allocation5 + $0x7d8] sm:$0xff]
    %v372 = vld [vmem:[#allocation5 + $0x7e0] sm:$0xff]
    %v373 = vld [vmem:[#allocation5 + $0x7e8] sm:$0xff]
    %v374 = vld [vmem:[#allocation5 + $0x7f0] sm:$0xff]
    %v375 = vld [vmem:[#allocation5 + $0x7f8] sm:$0xff]
    %v376 = vld [vmem:[#allocation5 + $0x800] sm:$0xff]
    %v377 = vld [vmem:[#allocation5 + $0x808] sm:$0xff]
    %v378 = vld [vmem:[#allocation5 + $0x810] sm:$0xff]
    %v379 = vld [vmem:[#allocation5 + $0x818] sm:$0xff]
    %v380 = vld [vmem:[#allocation5 + $0x820] sm:$0xff]
    %v381 = vld [vmem:[#allocation5 + $0x828] sm:$0xff]
    %v382 = vld [vmem:[#allocation5 + $0x830] sm:$0xff]
    %v383 = vld [vmem:[#allocation5 + $0x838] sm:$0xff]
    %v384 = vld [vmem:[#allocation5 + $0x840] sm:$0xff]
    %v385 = vld [vmem:[#allocation5 + $0x848] sm:$0xff]
    %v386 = vld [vmem:[#allocation5 + $0x850] sm:$0xff]
    %v387 = vld [vmem:[#allocation5 + $0x858] sm:$0xff]
    %v388 = vld [vmem:[#allocation5 + $0x860] sm:$0xff]
    %v389 = vld [vmem:[#allocation5 + $0x868] sm:$0xff]
    %v390 = vld [vmem:[#allocation5 + $0x870] sm:$0xff]
    %v391 = vld [vmem:[#allocation5 + $0x878] sm:$0xff]
    %v392 = vld [vmem:[#allocation5 + $0x880] sm:$0xff]
    %v393 = vld [vmem:[#allocation5 + $0x888] sm:$0xff]
    %v394 = vld [vmem:[#allocation5 + $0x890] sm:$0xff]
    %v395 = vld [vmem:[#allocation5 + $0x898] sm:$0xff]
    %v396 = vld [vmem:[#allocation5 + $0x8a0] sm:$0xff]
    %v397 = vld [vmem:[#allocation5 + $0x8a8] sm:$0xff]
    %v398 = vld [vmem:[#allocation5 + $0x8b0] sm:$0xff]
    %v399 = vld [vmem:[#allocation5 + $0x8b8] sm:$0xff]
    %v400 = vld [vmem:[#allocation5 + $0x8c0] sm:$0xff]
    %v401 = vld [vmem:[#allocation5 + $0x8c8] sm:$0xff]
    %v402 = vld [vmem:[#allocation5 + $0x8d0] sm:$0xff]
    %v403 = vld [vmem:[#allocation5 + $0x8d8] sm:$0xff]
    %v404 = vld [vmem:[#allocation5 + $0x8e0] sm:$0xff]
    %v405 = vld [vmem:[#allocation5 + $0x8e8] sm:$0xff]
    %v406 = vld [vmem:[#allocation5 + $0x8f0] sm:$0xff]
    %v407 = vld [vmem:[#allocation5 + $0x8f8] sm:$0xff]
    %v408 = vld [vmem:[#allocation5 + $0x900] sm:$0xff]
    %v409 = vld [vmem:[#allocation5 + $0x908] sm:$0xff]
    %v410 = vld [vmem:[#allocation5 + $0x910] sm:$0xff]
    %v411 = vld [vmem:[#allocation5 + $0x918] sm:$0xff]
    %v412 = vld [vmem:[#allocation5 + $0x920] sm:$0xff]
    %v413 = vld [vmem:[#allocation5 + $0x928] sm:$0xff]
    %v414 = vld [vmem:[#allocation7] sm:$0x1]
    %v416 = vlaneseq
    %v417 = vshrl.u32 %v416, 7
    %v418 = vsub.s32 0, %v417
    %v419 = vrot.slane %v414, %v418
    %vm421 = vcmask 392192
    %v423 = vsel %vm421, %v119, 0
    %425 = vmatprep.subr.mxu0 0.0
    %426 = vmatpush1.msra.mxu0 %v120
    %427 = vmatprep.subr.mxu0 0.0
    %428 = vmatpush1.msra.mxu0 %v121
    %429 = vmatprep.subr.mxu0 0.0
    %430 = vmatpush1.msra.mxu0 %v122
    %431 = vmatprep.subr.mxu0 0.0
    %432 = vmatpush1.msra.mxu0 %v123
    %433 = vmatprep.subr.mxu0 0.0
    %434 = vmatpush1.msra.mxu0 %v124
    %435 = vmatprep.subr.mxu0 0.0
    %436 = vmatpush1.msra.mxu0 %v125
    %437 = vmatprep.subr.mxu0 0.0
    %438 = vmatpush1.msra.mxu0 %v126
    %439 = vmatprep.subr.mxu0 0.0
    %440 = vmatpush1.msra.mxu0 %v127
    %441 = vmatprep.subr.mxu0 0.0
    %442 = vmatpush1.msra.mxu0 %v128
    %443 = vmatprep.subr.mxu0 0.0
    %444 = vmatpush1.msra.mxu0 %v129
    %445 = vmatprep.subr.mxu0 0.0
    %446 = vmatpush1.msra.mxu0 %v130
    %447 = vmatprep.subr.mxu0 0.0
    %448 = vmatpush1.msra.mxu0 %v131
    %449 = vmatprep.subr.mxu0 0.0
    %450 = vmatpush1.msra.mxu0 %v132
    %451 = vmatprep.subr.mxu0 0.0
    %452 = vmatpush1.msra.mxu0 %v133
    %453 = vmatprep.subr.mxu0 0.0
    %454 = vmatpush1.msra.mxu0 %v134
    %455 = vmatprep.subr.mxu0 0.0
    %456 = vmatpush1.msra.mxu0 %v135
    %457 = vmatprep.subr.mxu0 0.0
    %458 = vmatpush1.msra.mxu0 %v136
    %459 = vmatprep.subr.mxu0 0.0
    %460 = vmatpush1.msra.mxu0 %v137
    %461 = vmatprep.subr.mxu0 0.0
    %462 = vmatpush1.msra.mxu0 %v138
    %463 = vmatprep.subr.mxu0 0.0
    %464 = vmatpush1.msra.mxu0 %v139
    %465 = vmatprep.subr.mxu0 0.0
    %466 = vmatpush1.msra.mxu0 %v140
    %467 = vmatprep.subr.mxu0 0.0
    %468 = vmatpush1.msra.mxu0 %v141
    %469 = vmatprep.subr.mxu0 0.0
    %470 = vmatpush1.msra.mxu0 %v142
    %471 = vmatprep.subr.mxu0 0.0
    %472 = vmatpush1.msra.mxu0 %v143
    %473 = vmatprep.subr.mxu0 0.0
    %474 = vmatpush1.msra.mxu0 %v144
    %475 = vmatprep.subr.mxu0 0.0
    %476 = vmatpush1.msra.mxu0 %v145
    %477 = vmatprep.subr.mxu0 0.0
    %478 = vmatpush1.msra.mxu0 %v146
    %479 = vmatprep.subr.mxu0 0.0
    %480 = vmatpush1.msra.mxu0 %v147
    %481 = vmatprep.subr.mxu0 0.0
    %482 = vmatpush1.msra.mxu0 %v148
    %483 = vmatprep.subr.mxu0 0.0
    %484 = vmatpush1.msra.mxu0 %v149
    %485 = vmatprep.subr.mxu0 0.0
    %486 = vmatpush1.msra.mxu0 %v150
    %487 = vmatprep.subr.mxu0 0.0
    %488 = vmatpush1.msra.mxu0 %v151
    %489 = vmatprep.mubr.f32.mxu0 %v102
    %490 = vmatmul.mubr.f32.gmra.mrb[0].mxu0 %v101
    %v491 = vpop.f32.mrb[0].mxu0
    %v492 = vadd.f32 %v419, %v491
    %v493 = vpop.f32.mrb[0].mxu0
    %494 = vdwg.mxu0
    %495 = vmatprep.subr.mxu0 0.0
    %496 = vmatpush1.msra.mxu0 %v152
    %497 = vmatprep.subr.mxu0 0.0
    %498 = vmatpush1.msra.mxu0 %v153
    %499 = vmatprep.subr.mxu0 0.0
    %500 = vmatpush1.msra.mxu0 %v154
    %501 = vmatprep.subr.mxu0 0.0
    %502 = vmatpush1.msra.mxu0 %v155
    %503 = vmatprep.subr.mxu0 0.0
    %504 = vmatpush1.msra.mxu0 %v156
    %505 = vmatprep.subr.mxu0 0.0
    %506 = vmatpush1.msra.mxu0 %v157
    %507 = vmatprep.subr.mxu0 0.0
    %508 = vmatpush1.msra.mxu0 %v158
    %509 = vmatprep.subr.mxu0 0.0
    %510 = vmatpush1.msra.mxu0 %v159
    %511 = vmatprep.subr.mxu0 0.0
    %512 = vmatpush1.msra.mxu0 %v160
    %513 = vmatprep.subr.mxu0 0.0
    %514 = vmatpush1.msra.mxu0 %v161
    %515 = vmatprep.subr.mxu0 0.0
    %516 = vmatpush1.msra.mxu0 %v162
    %517 = vmatprep.subr.mxu0 0.0
    %518 = vmatpush1.msra.mxu0 %v163
    %519 = vmatprep.subr.mxu0 0.0
    %520 = vmatpush1.msra.mxu0 %v164
    %521 = vmatprep.subr.mxu0 0.0
    %522 = vmatpush1.msra.mxu0 %v165
    %523 = vmatprep.subr.mxu0 0.0
    %524 = vmatpush1.msra.mxu0 %v166
    %525 = vmatprep.subr.mxu0 0.0
    %526 = vmatpush1.msra.mxu0 %v167
    %527 = vmatprep.subr.mxu0 0.0
    %528 = vmatpush1.msra.mxu0 %v168
    %529 = vmatprep.subr.mxu0 0.0
    %530 = vmatpush1.msra.mxu0 %v169
    %531 = vmatprep.subr.mxu0 0.0
    %532 = vmatpush1.msra.mxu0 %v170
    %533 = vmatprep.subr.mxu0 0.0
    %534 = vmatpush1.msra.mxu0 %v171
    %535 = vmatprep.subr.mxu0 0.0
    %536 = vmatpush1.msra.mxu0 %v172
    %537 = vmatprep.subr.mxu0 0.0
    %538 = vmatpush1.msra.mxu0 %v173
    %539 = vmatprep.subr.mxu0 0.0
    %540 = vmatpush1.msra.mxu0 %v174
    %541 = vmatprep.subr.mxu0 0.0
    %542 = vmatpush1.msra.mxu0 %v175
    %543 = vmatprep.subr.mxu0 0.0
    %544 = vmatpush1.msra.mxu0 %v176
    %545 = vmatprep.subr.mxu0 0.0
    %546 = vmatpush1.msra.mxu0 %v177
    %547 = vmatprep.subr.mxu0 0.0
    %548 = vmatpush1.msra.mxu0 %v178
    %549 = vmatprep.subr.mxu0 0.0
    %550 = vmatpush1.msra.mxu0 %v179
    %551 = vmatprep.subr.mxu0 0.0
    %552 = vmatpush1.msra.mxu0 %v180
    %553 = vmatprep.subr.mxu0 0.0
    %554 = vmatpush1.msra.mxu0 %v181
    %555 = vmatprep.subr.mxu0 0.0
    %556 = vmatpush1.msra.mxu0 %v182
    %557 = vmatprep.subr.mxu0 0.0
    %558 = vmatpush1.msra.mxu0 %v183
    %559 = vmatprep.mubr.f32.mxu0 %v104
    %560 = vmatmul.mubr.f32.gmra.mrb[0].mxu0 %v103
    %v561 = vpop.f32.mrb[0].mxu0
    %v562 = vadd.f32 %v492, %v561
    %v563 = vpop.f32.mrb[0].mxu0
    %564 = vdwg.mxu0
    %565 = vmatprep.subr.mxu0 0.0
    %566 = vmatpush1.msra.mxu0 %v184
    %567 = vmatprep.subr.mxu0 0.0
    %568 = vmatpush1.msra.mxu0 %v185
    %569 = vmatprep.subr.mxu0 0.0
    %570 = vmatpush1.msra.mxu0 %v186
    %571 = vmatprep.subr.mxu0 0.0
    %572 = vmatpush1.msra.mxu0 %v187
    %573 = vmatprep.subr.mxu0 0.0
    %574 = vmatpush1.msra.mxu0 %v188
    %575 = vmatprep.subr.mxu0 0.0
    %576 = vmatpush1.msra.mxu0 %v189
    %577 = vmatprep.subr.mxu0 0.0
    %578 = vmatpush1.msra.mxu0 %v190
    %579 = vmatprep.subr.mxu0 0.0
    %580 = vmatpush1.msra.mxu0 %v191
    %581 = vmatprep.subr.mxu0 0.0
    %582 = vmatpush1.msra.mxu0 %v192
    %583 = vmatprep.subr.mxu0 0.0
    %584 = vmatpush1.msra.mxu0 %v193
    %585 = vmatprep.subr.mxu0 0.0
    %586 = vmatpush1.msra.mxu0 %v194
    %587 = vmatprep.subr.mxu0 0.0
    %588 = vmatpush1.msra.mxu0 %v195
    %589 = vmatprep.subr.mxu0 0.0
    %590 = vmatpush1.msra.mxu0 %v196
    %591 = vmatprep.subr.mxu0 0.0
    %592 = vmatpush1.msra.mxu0 %v197
    %593 = vmatprep.subr.mxu0 0.0
    %594 = vmatpush1.msra.mxu0 %v198
    %595 = vmatprep.subr.mxu0 0.0
    %596 = vmatpush1.msra.mxu0 %v199
    %597 = vmatprep.subr.mxu0 0.0
    %598 = vmatpush1.msra.mxu0 %v200
    %599 = vmatprep.subr.mxu0 0.0
    %600 = vmatpush1.msra.mxu0 %v201
    %601 = vmatprep.subr.mxu0 0.0
    %602 = vmatpush1.msra.mxu0 %v202
    %603 = vmatprep.subr.mxu0 0.0
    %604 = vmatpush1.msra.mxu0 %v203
    %605 = vmatprep.subr.mxu0 0.0
    %606 = vmatpush1.msra.mxu0 %v204
    %607 = vmatprep.subr.mxu0 0.0
    %608 = vmatpush1.msra.mxu0 %v205
    %609 = vmatprep.subr.mxu0 0.0
    %610 = vmatpush1.msra.mxu0 %v206
    %611 = vmatprep.subr.mxu0 0.0
    %612 = vmatpush1.msra.mxu0 %v207
    %613 = vmatprep.subr.mxu0 0.0
    %614 = vmatpush1.msra.mxu0 %v208
    %615 = vmatprep.subr.mxu0 0.0
    %616 = vmatpush1.msra.mxu0 %v209
    %617 = vmatprep.subr.mxu0 0.0
    %618 = vmatpush1.msra.mxu0 %v210
    %619 = vmatprep.subr.mxu0 0.0
    %620 = vmatpush1.msra.mxu0 %v211
    %621 = vmatprep.subr.mxu0 0.0
    %622 = vmatpush1.msra.mxu0 %v212
    %623 = vmatprep.subr.mxu0 0.0
    %624 = vmatpush1.msra.mxu0 %v213
    %625 = vmatprep.subr.mxu0 0.0
    %626 = vmatpush1.msra.mxu0 %v214
    %627 = vmatprep.subr.mxu0 0.0
    %628 = vmatpush1.msra.mxu0 %v215
    %629 = vmatprep.mubr.f32.mxu0 %v106
    %630 = vmatmul.mubr.f32.gmra.mrb[0].mxu0 %v105
    %v631 = vpop.f32.mrb[0].mxu0
    %v632 = vadd.f32 %v562, %v631
    %v633 = vpop.f32.mrb[0].mxu0
    %634 = vdwg.mxu0
    %635 = vmatprep.subr.mxu0 0.0
    %636 = vmatpush1.msra.mxu0 %v216
    %637 = vmatprep.subr.mxu0 0.0
    %638 = vmatpush1.msra.mxu0 %v217
    %639 = vmatprep.subr.mxu0 0.0
    %640 = vmatpush1.msra.mxu0 %v218
    %641 = vmatprep.subr.mxu0 0.0
    %642 = vmatpush1.msra.mxu0 %v219
    %643 = vmatprep.subr.mxu0 0.0
    %644 = vmatpush1.msra.mxu0 %v220
    %645 = vmatprep.subr.mxu0 0.0
    %646 = vmatpush1.msra.mxu0 %v221
    %647 = vmatprep.subr.mxu0 0.0
    %648 = vmatpush1.msra.mxu0 %v222
    %649 = vmatprep.subr.mxu0 0.0
    %650 = vmatpush1.msra.mxu0 %v223
    %651 = vmatprep.subr.mxu0 0.0
    %652 = vmatpush1.msra.mxu0 %v224
    %653 = vmatprep.subr.mxu0 0.0
    %654 = vmatpush1.msra.mxu0 %v225
    %655 = vmatprep.subr.mxu0 0.0
    %656 = vmatpush1.msra.mxu0 %v226
    %657 = vmatprep.subr.mxu0 0.0
    %658 = vmatpush1.msra.mxu0 %v227
    %659 = vmatprep.subr.mxu0 0.0
    %660 = vmatpush1.msra.mxu0 %v228
    %661 = vmatprep.subr.mxu0 0.0
    %662 = vmatpush1.msra.mxu0 %v229
    %663 = vmatprep.subr.mxu0 0.0
    %664 = vmatpush1.msra.mxu0 %v230
    %665 = vmatprep.subr.mxu0 0.0
    %666 = vmatpush1.msra.mxu0 %v231
    %667 = vmatprep.subr.mxu0 0.0
    %668 = vmatpush1.msra.mxu0 %v232
    %669 = vmatprep.subr.mxu0 0.0
    %670 = vmatpush1.msra.mxu0 %v233
    %671 = vmatprep.subr.mxu0 0.0
    %672 = vmatpush1.msra.mxu0 %v234
    %673 = vmatprep.subr.mxu0 0.0
    %674 = vmatpush1.msra.mxu0 %v235
    %675 = vmatprep.subr.mxu0 0.0
    %676 = vmatpush1.msra.mxu0 %v236
    %677 = vmatprep.subr.mxu0 0.0
    %678 = vmatpush1.msra.mxu0 %v237
    %679 = vmatprep.subr.mxu0 0.0
    %680 = vmatpush1.msra.mxu0 %v238
    %681 = vmatprep.subr.mxu0 0.0
    %682 = vmatpush1.msra.mxu0 %v239
    %683 = vmatprep.subr.mxu0 0.0
    %684 = vmatpush1.msra.mxu0 %v240
    %685 = vmatprep.subr.mxu0 0.0
    %686 = vmatpush1.msra.mxu0 %v241
    %687 = vmatprep.subr.mxu0 0.0
    %688 = vmatpush1.msra.mxu0 %v242
    %689 = vmatprep.subr.mxu0 0.0
    %690 = vmatpush1.msra.mxu0 %v243
    %691 = vmatprep.subr.mxu0 0.0
    %692 = vmatpush1.msra.mxu0 %v244
    %693 = vmatprep.subr.mxu0 0.0
    %694 = vmatpush1.msra.mxu0 %v245
    %695 = vmatprep.subr.mxu0 0.0
    %696 = vmatpush1.msra.mxu0 %v246
    %697 = vmatprep.subr.mxu0 0.0
    %698 = vmatpush1.msra.mxu0 %v247
    %699 = vmatprep.mubr.f32.mxu0 %v108
    %700 = vmatmul.mubr.f32.gmra.mrb[0].mxu0 %v107
    %v701 = vpop.f32.mrb[0].mxu0
    %v702 = vadd.f32 %v632, %v701
    %v703 = vpop.f32.mrb[0].mxu0
    %704 = vdwg.mxu0
    %705 = vmatprep.subr.mxu0 0.0
    %706 = vmatpush1.msra.mxu0 %v248
    %707 = vmatprep.subr.mxu0 0.0
    %708 = vmatpush1.msra.mxu0 %v249
    %709 = vmatprep.subr.mxu0 0.0
    %710 = vmatpush1.msra.mxu0 %v250
    %711 = vmatprep.subr.mxu0 0.0
    %712 = vmatpush1.msra.mxu0 %v251
    %713 = vmatprep.subr.mxu0 0.0
    %714 = vmatpush1.msra.mxu0 %v252
    %715 = vmatprep.subr.mxu0 0.0
    %716 = vmatpush1.msra.mxu0 %v253
    %717 = vmatprep.subr.mxu0 0.0
    %718 = vmatpush1.msra.mxu0 %v254
    %719 = vmatprep.subr.mxu0 0.0
    %720 = vmatpush1.msra.mxu0 %v255
    %721 = vmatprep.subr.mxu0 0.0
    %722 = vmatpush1.msra.mxu0 %v256
    %723 = vmatprep.subr.mxu0 0.0
    %724 = vmatpush1.msra.mxu0 %v257
    %725 = vmatprep.subr.mxu0 0.0
    %726 = vmatpush1.msra.mxu0 %v258
    %727 = vmatprep.subr.mxu0 0.0
    %728 = vmatpush1.msra.mxu0 %v259
    %729 = vmatprep.subr.mxu0 0.0
    %730 = vmatpush1.msra.mxu0 %v260
    %731 = vmatprep.subr.mxu0 0.0
    %732 = vmatpush1.msra.mxu0 %v261
    %733 = vmatprep.subr.mxu0 0.0
    %734 = vmatpush1.msra.mxu0 %v262
    %735 = vmatprep.subr.mxu0 0.0
    %736 = vmatpush1.msra.mxu0 %v263
    %737 = vmatprep.subr.mxu0 0.0
    %738 = vmatpush1.msra.mxu0 %v264
    %739 = vmatprep.subr.mxu0 0.0
    %740 = vmatpush1.msra.mxu0 %v265
    %741 = vmatprep.subr.mxu0 0.0
    %742 = vmatpush1.msra.mxu0 %v266
    %743 = vmatprep.subr.mxu0 0.0
    %744 = vmatpush1.msra.mxu0 %v267
    %745 = vmatprep.subr.mxu0 0.0
    %746 = vmatpush1.msra.mxu0 %v268
    %747 = vmatprep.subr.mxu0 0.0
    %748 = vmatpush1.msra.mxu0 %v269
    %749 = vmatprep.subr.mxu0 0.0
    %750 = vmatpush1.msra.mxu0 %v270
    %751 = vmatprep.subr.mxu0 0.0
    %752 = vmatpush1.msra.mxu0 %v271
    %753 = vmatprep.subr.mxu0 0.0
    %754 = vmatpush1.msra.mxu0 %v272
    %755 = vmatprep.subr.mxu0 0.0
    %756 = vmatpush1.msra.mxu0 %v273
    %757 = vmatprep.subr.mxu0 0.0
    %758 = vmatpush1.msra.mxu0 %v274
    %759 = vmatprep.subr.mxu0 0.0
    %760 = vmatpush1.msra.mxu0 %v275
    %761 = vmatprep.subr.mxu0 0.0
    %762 = vmatpush1.msra.mxu0 %v276
    %763 = vmatprep.subr.mxu0 0.0
    %764 = vmatpush1.msra.mxu0 %v277
    %765 = vmatprep.subr.mxu0 0.0
    %766 = vmatpush1.msra.mxu0 %v278
    %767 = vmatprep.subr.mxu0 0.0
    %768 = vmatpush1.msra.mxu0 %v279
    %769 = vmatprep.mubr.f32.mxu0 %v110
    %770 = vmatmul.mubr.f32.gmra.mrb[0].mxu0 %v109
    %v771 = vpop.f32.mrb[0].mxu0
    %v772 = vadd.f32 %v702, %v771
    %v773 = vpop.f32.mrb[0].mxu0
    %774 = vdwg.mxu0
    %775 = vmatprep.subr.mxu0 0.0
    %776 = vmatpush1.msra.mxu0 %v280
    %777 = vmatprep.subr.mxu0 0.0
    %778 = vmatpush1.msra.mxu0 %v281
    %779 = vmatprep.subr.mxu0 0.0
    %780 = vmatpush1.msra.mxu0 %v282
    %781 = vmatprep.subr.mxu0 0.0
    %782 = vmatpush1.msra.mxu0 %v283
    %783 = vmatprep.subr.mxu0 0.0
    %784 = vmatpush1.msra.mxu0 %v284
    %785 = vmatprep.subr.mxu0 0.0
    %786 = vmatpush1.msra.mxu0 %v285
    %787 = vmatprep.subr.mxu0 0.0
    %788 = vmatpush1.msra.mxu0 %v286
    %789 = vmatprep.subr.mxu0 0.0
    %790 = vmatpush1.msra.mxu0 %v287
    %791 = vmatprep.subr.mxu0 0.0
    %792 = vmatpush1.msra.mxu0 %v288
    %793 = vmatprep.subr.mxu0 0.0
    %794 = vmatpush1.msra.mxu0 %v289
    %795 = vmatprep.subr.mxu0 0.0
    %796 = vmatpush1.msra.mxu0 %v290
    %797 = vmatprep.subr.mxu0 0.0
    %798 = vmatpush1.msra.mxu0 %v291
    %799 = vmatprep.subr.mxu0 0.0
    %800 = vmatpush1.msra.mxu0 %v292
    %801 = vmatprep.subr.mxu0 0.0
    %802 = vmatpush1.msra.mxu0 %v293
    %803 = vmatprep.subr.mxu0 0.0
    %804 = vmatpush1.msra.mxu0 %v294
    %805 = vmatprep.subr.mxu0 0.0
    %806 = vmatpush1.msra.mxu0 %v295
    %807 = vmatprep.subr.mxu0 0.0
    %808 = vmatpush1.msra.mxu0 %v296
    %809 = vmatprep.subr.mxu0 0.0
    %810 = vmatpush1.msra.mxu0 %v297
    %811 = vmatprep.subr.mxu0 0.0
    %812 = vmatpush1.msra.mxu0 %v298
    %813 = vmatprep.subr.mxu0 0.0
    %814 = vmatpush1.msra.mxu0 %v299
    %815 = vmatprep.subr.mxu0 0.0
    %816 = vmatpush1.msra.mxu0 %v300
    %817 = vmatprep.subr.mxu0 0.0
    %818 = vmatpush1.msra.mxu0 %v301
    %819 = vmatprep.subr.mxu0 0.0
    %820 = vmatpush1.msra.mxu0 %v302
    %821 = vmatprep.subr.mxu0 0.0
    %822 = vmatpush1.msra.mxu0 %v303
    %823 = vmatprep.subr.mxu0 0.0
    %824 = vmatpush1.msra.mxu0 %v304
    %825 = vmatprep.subr.mxu0 0.0
    %826 = vmatpush1.msra.mxu0 %v305
    %827 = vmatprep.subr.mxu0 0.0
    %828 = vmatpush1.msra.mxu0 %v306
    %829 = vmatprep.subr.mxu0 0.0
    %830 = vmatpush1.msra.mxu0 %v307
    %831 = vmatprep.subr.mxu0 0.0
    %832 = vmatpush1.msra.mxu0 %v308
    %833 = vmatprep.subr.mxu0 0.0
    %834 = vmatpush1.msra.mxu0 %v309
    %835 = vmatprep.subr.mxu0 0.0
    %836 = vmatpush1.msra.mxu0 %v310
    %837 = vmatprep.subr.mxu0 0.0
    %838 = vmatpush1.msra.mxu0 %v311
    %839 = vmatprep.mubr.f32.mxu0 %v112
    %840 = vmatmul.mubr.f32.gmra.mrb[0].mxu0 %v111
    %v841 = vpop.f32.mrb[0].mxu0
    %v842 = vadd.f32 %v772, %v841
    %v843 = vpop.f32.mrb[0].mxu0
    %844 = vdwg.mxu0
    %845 = vmatprep.subr.mxu0 0.0
    %846 = vmatpush1.msra.mxu0 %v312
    %847 = vmatprep.subr.mxu0 0.0
    %848 = vmatpush1.msra.mxu0 %v313
    %849 = vmatprep.subr.mxu0 0.0
    %850 = vmatpush1.msra.mxu0 %v314
    %851 = vmatprep.subr.mxu0 0.0
    %852 = vmatpush1.msra.mxu0 %v315
    %853 = vmatprep.subr.mxu0 0.0
    %854 = vmatpush1.msra.mxu0 %v316
    %855 = vmatprep.subr.mxu0 0.0
    %856 = vmatpush1.msra.mxu0 %v317
    %857 = vmatprep.subr.mxu0 0.0
    %858 = vmatpush1.msra.mxu0 %v318
    %859 = vmatprep.subr.mxu0 0.0
    %860 = vmatpush1.msra.mxu0 %v319
    %861 = vmatprep.subr.mxu0 0.0
    %862 = vmatpush1.msra.mxu0 %v320
    %863 = vmatprep.subr.mxu0 0.0
    %864 = vmatpush1.msra.mxu0 %v321
    %865 = vmatprep.subr.mxu0 0.0
    %866 = vmatpush1.msra.mxu0 %v322
    %867 = vmatprep.subr.mxu0 0.0
    %868 = vmatpush1.msra.mxu0 %v323
    %869 = vmatprep.subr.mxu0 0.0
    %870 = vmatpush1.msra.mxu0 %v324
    %871 = vmatprep.subr.mxu0 0.0
    %872 = vmatpush1.msra.mxu0 %v325
    %873 = vmatprep.subr.mxu0 0.0
    %874 = vmatpush1.msra.mxu0 %v326
    %875 = vmatprep.subr.mxu0 0.0
    %876 = vmatpush1.msra.mxu0 %v327
    %877 = vmatprep.subr.mxu0 0.0
    %878 = vmatpush1.msra.mxu0 %v328
    %879 = vmatprep.subr.mxu0 0.0
    %880 = vmatpush1.msra.mxu0 %v329
    %881 = vmatprep.subr.mxu0 0.0
    %882 = vmatpush1.msra.mxu0 %v330
    %883 = vmatprep.subr.mxu0 0.0
    %884 = vmatpush1.msra.mxu0 %v331
    %885 = vmatprep.subr.mxu0 0.0
    %886 = vmatpush1.msra.mxu0 %v332
    %887 = vmatprep.subr.mxu0 0.0
    %888 = vmatpush1.msra.mxu0 %v333
    %889 = vmatprep.subr.mxu0 0.0
    %890 = vmatpush1.msra.mxu0 %v334
    %891 = vmatprep.subr.mxu0 0.0
    %892 = vmatpush1.msra.mxu0 %v335
    %893 = vmatprep.subr.mxu0 0.0
    %894 = vmatpush1.msra.mxu0 %v336
    %895 = vmatprep.subr.mxu0 0.0
    %896 = vmatpush1.msra.mxu0 %v337
    %897 = vmatprep.subr.mxu0 0.0
    %898 = vmatpush1.msra.mxu0 %v338
    %899 = vmatprep.subr.mxu0 0.0
    %900 = vmatpush1.msra.mxu0 %v339
    %901 = vmatprep.subr.mxu0 0.0
    %902 = vmatpush1.msra.mxu0 %v340
    %903 = vmatprep.subr.mxu0 0.0
    %904 = vmatpush1.msra.mxu0 %v341
    %905 = vmatprep.subr.mxu0 0.0
    %906 = vmatpush1.msra.mxu0 %v342
    %907 = vmatprep.subr.mxu0 0.0
    %908 = vmatpush1.msra.mxu0 %v343
    %909 = vmatprep.mubr.f32.mxu0 %v114
    %910 = vmatmul.mubr.f32.gmra.mrb[0].mxu0 %v113
    %v911 = vpop.f32.mrb[0].mxu0
    %v912 = vadd.f32 %v842, %v911
    %v913 = vpop.f32.mrb[0].mxu0
    %914 = vdwg.mxu0
    %915 = vmatprep.subr.mxu0 0.0
    %916 = vmatpush1.msra.mxu0 %v344
    %917 = vmatprep.subr.mxu0 0.0
    %918 = vmatpush1.msra.mxu0 %v345
    %919 = vmatprep.subr.mxu0 0.0
    %920 = vmatpush1.msra.mxu0 %v346
    %921 = vmatprep.subr.mxu0 0.0
    %922 = vmatpush1.msra.mxu0 %v347
    %923 = vmatprep.subr.mxu0 0.0
    %924 = vmatpush1.msra.mxu0 %v348
    %925 = vmatprep.subr.mxu0 0.0
    %926 = vmatpush1.msra.mxu0 %v349
    %927 = vmatprep.subr.mxu0 0.0
    %928 = vmatpush1.msra.mxu0 %v350
    %929 = vmatprep.subr.mxu0 0.0
    %930 = vmatpush1.msra.mxu0 %v351
    %931 = vmatprep.subr.mxu0 0.0
    %932 = vmatpush1.msra.mxu0 %v352
    %933 = vmatprep.subr.mxu0 0.0
    %934 = vmatpush1.msra.mxu0 %v353
    %935 = vmatprep.subr.mxu0 0.0
    %936 = vmatpush1.msra.mxu0 %v354
    %937 = vmatprep.subr.mxu0 0.0
    %938 = vmatpush1.msra.mxu0 %v355
    %939 = vmatprep.subr.mxu0 0.0
    %940 = vmatpush1.msra.mxu0 %v356
    %941 = vmatprep.subr.mxu0 0.0
    %942 = vmatpush1.msra.mxu0 %v357
    %943 = vmatprep.subr.mxu0 0.0
    %944 = vmatpush1.msra.mxu0 %v358
    %945 = vmatprep.subr.mxu0 0.0
    %946 = vmatpush1.msra.mxu0 %v359
    %947 = vmatprep.subr.mxu0 0.0
    %948 = vmatpush1.msra.mxu0 %v360
    %949 = vmatprep.subr.mxu0 0.0
    %950 = vmatpush1.msra.mxu0 %v361
    %951 = vmatprep.subr.mxu0 0.0
    %952 = vmatpush1.msra.mxu0 %v362
    %953 = vmatprep.subr.mxu0 0.0
    %954 = vmatpush1.msra.mxu0 %v363
    %955 = vmatprep.subr.mxu0 0.0
    %956 = vmatpush1.msra.mxu0 %v364
    %957 = vmatprep.subr.mxu0 0.0
    %958 = vmatpush1.msra.mxu0 %v365
    %959 = vmatprep.subr.mxu0 0.0
    %960 = vmatpush1.msra.mxu0 %v366
    %961 = vmatprep.subr.mxu0 0.0
    %962 = vmatpush1.msra.mxu0 %v367
    %963 = vmatprep.subr.mxu0 0.0
    %964 = vmatpush1.msra.mxu0 %v368
    %965 = vmatprep.subr.mxu0 0.0
    %966 = vmatpush1.msra.mxu0 %v369
    %967 = vmatprep.subr.mxu0 0.0
    %968 = vmatpush1.msra.mxu0 %v370
    %969 = vmatprep.subr.mxu0 0.0
    %970 = vmatpush1.msra.mxu0 %v371
    %971 = vmatprep.subr.mxu0 0.0
    %972 = vmatpush1.msra.mxu0 %v372
    %973 = vmatprep.subr.mxu0 0.0
    %974 = vmatpush1.msra.mxu0 %v373
    %975 = vmatprep.subr.mxu0 0.0
    %976 = vmatpush1.msra.mxu0 %v374
    %977 = vmatprep.subr.mxu0 0.0
    %978 = vmatpush1.msra.mxu0 %v375
    %979 = vmatprep.mubr.f32.mxu0 %v116
    %980 = vmatmul.mubr.f32.gmra.mrb[0].mxu0 %v115
    %v981 = vpop.f32.mrb[0].mxu0
    %v982 = vadd.f32 %v912, %v981
    %v983 = vpop.f32.mrb[0].mxu0
    %984 = vdwg.mxu0
    %985 = vmatprep.subr.mxu0 0.0
    %986 = vmatpush1.msra.mxu0 %v376
    %987 = vmatprep.subr.mxu0 0.0
    %988 = vmatpush1.msra.mxu0 %v377
    %989 = vmatprep.subr.mxu0 0.0
    %990 = vmatpush1.msra.mxu0 %v378
    %991 = vmatprep.subr.mxu0 0.0
    %992 = vmatpush1.msra.mxu0 %v379
    %993 = vmatprep.subr.mxu0 0.0
    %994 = vmatpush1.msra.mxu0 %v380
    %995 = vmatprep.subr.mxu0 0.0
    %996 = vmatpush1.msra.mxu0 %v381
    %997 = vmatprep.subr.mxu0 0.0
    %998 = vmatpush1.msra.mxu0 %v382
    %999 = vmatprep.subr.mxu0 0.0
    %1000 = vmatpush1.msra.mxu0 %v383
    %1001 = vmatprep.subr.mxu0 0.0
    %1002 = vmatpush1.msra.mxu0 %v384
    %1003 = vmatprep.subr.mxu0 0.0
    %1004 = vmatpush1.msra.mxu0 %v385
    %1005 = vmatprep.subr.mxu0 0.0
    %1006 = vmatpush1.msra.mxu0 %v386
    %1007 = vmatprep.subr.mxu0 0.0
    %1008 = vmatpush1.msra.mxu0 %v387
    %1009 = vmatprep.subr.mxu0 0.0
    %1010 = vmatpush1.msra.mxu0 %v388
    %1011 = vmatprep.subr.mxu0 0.0
    %1012 = vmatpush1.msra.mxu0 %v389
    %1013 = vmatprep.subr.mxu0 0.0
    %1014 = vmatpush1.msra.mxu0 %v390
    %1015 = vmatprep.subr.mxu0 0.0
    %1016 = vmatpush1.msra.mxu0 %v391
    %1017 = vmatprep.subr.mxu0 0.0
    %1018 = vmatpush1.msra.mxu0 %v392
    %1019 = vmatprep.subr.mxu0 0.0
    %1020 = vmatpush1.msra.mxu0 %v393
    %1021 = vmatprep.subr.mxu0 0.0
    %1022 = vmatpush1.msra.mxu0 %v394
    %1023 = vmatprep.subr.mxu0 0.0
    %1024 = vmatpush1.msra.mxu0 %v395
    %1025 = vmatprep.subr.mxu0 0.0
    %1026 = vmatpush1.msra.mxu0 %v396
    %1027 = vmatprep.subr.mxu0 0.0
    %1028 = vmatpush1.msra.mxu0 %v397
    %1029 = vmatprep.subr.mxu0 0.0
    %1030 = vmatpush1.msra.mxu0 %v398
    %1031 = vmatprep.subr.mxu0 0.0
    %1032 = vmatpush1.msra.mxu0 %v399
    %1033 = vmatprep.subr.mxu0 0.0
    %1034 = vmatpush1.msra.mxu0 %v400
    %1035 = vmatprep.subr.mxu0 0.0
    %1036 = vmatpush1.msra.mxu0 %v401
    %1037 = vmatprep.subr.mxu0 0.0
    %1038 = vmatpush1.msra.mxu0 %v402
    %1039 = vmatprep.subr.mxu0 0.0
    %1040 = vmatpush1.msra.mxu0 %v403
    %1041 = vmatprep.subr.mxu0 0.0
    %1042 = vmatpush1.msra.mxu0 %v404
    %1043 = vmatprep.subr.mxu0 0.0
    %1044 = vmatpush1.msra.mxu0 %v405
    %1045 = vmatprep.subr.mxu0 0.0
    %1046 = vmatpush1.msra.mxu0 %v406
    %1047 = vmatprep.subr.mxu0 0.0
    %1048 = vmatpush1.msra.mxu0 %v407
    %1049 = vmatprep.mubr.f32.mxu0 %v118
    %1050 = vmatmul.mubr.f32.gmra.mrb[0].mxu0 %v117
    %v1051 = vpop.f32.mrb[0].mxu0
    %v1052 = vadd.f32 %v982, %v1051
    %v1053 = vpop.f32.mrb[0].mxu0
    %1054 = vdwg.mxu0
    %1055 = vmatprep.subr.mxu0 0.0
    %1056 = vmatpush1.msra.mxu0 %v408
    %1057 = vmatprep.subr.mxu0 0.0
    %1058 = vmatpush1.msra.mxu0 %v409
    %1059 = vmatprep.subr.mxu0 0.0
    %1060 = vmatpush1.msra.mxu0 %v410
    %1061 = vmatprep.subr.mxu0 0.0
    %1062 = vmatpush1.msra.mxu0 %v411
    %1063 = vmatprep.subr.mxu0 0.0
    %1064 = vmatpush1.msra.mxu0 %v412
    %1065 = vmatprep.subr.mxu0 0.0
    %1066 = vmatpush1.msra.mxu0 %v413
    %1067 = vmatprep.subr.mxu0 0.0
    %1068 = vmatpush1.msra.mxu0 0.0
    %1069 = vmatprep.subr.mxu0 0.0
    %1070 = vmatpush1.msra.mxu0 0.0
    %1071 = vmatprep.subr.mxu0 0.0
    %1072 = vmatpush1.msra.mxu0 0.0
    %1073 = vmatprep.subr.mxu0 0.0
    %1074 = vmatpush1.msra.mxu0 0.0
    %1075 = vmatprep.subr.mxu0 0.0
    %1076 = vmatpush1.msra.mxu0 0.0
    %1077 = vmatprep.subr.mxu0 0.0
    %1078 = vmatpush1.msra.mxu0 0.0
    %1079 = vmatprep.subr.mxu0 0.0
    %1080 = vmatpush1.msra.mxu0 0.0
    %1081 = vmatprep.subr.mxu0 0.0
    %1082 = vmatpush1.msra.mxu0 0.0
    %1083 = vmatprep.subr.mxu0 0.0
    %1084 = vmatpush1.msra.mxu0 0.0
    %1085 = vmatprep.subr.mxu0 0.0
    %1086 = vmatpush1.msra.mxu0 0.0
    %1087 = vmatprep.subr.mxu0 0.0
    %1088 = vmatpush1.msra.mxu0 0.0
    %1089 = vmatprep.subr.mxu0 0.0
    %1090 = vmatpush1.msra.mxu0 0.0
    %1091 = vmatprep.subr.mxu0 0.0
    %1092 = vmatpush1.msra.mxu0 0.0
    %1093 = vmatprep.subr.mxu0 0.0
    %1094 = vmatpush1.msra.mxu0 0.0
    %1095 = vmatprep.subr.mxu0 0.0
    %1096 = vmatpush1.msra.mxu0 0.0
    %1097 = vmatprep.subr.mxu0 0.0
    %1098 = vmatpush1.msra.mxu0 0.0
    %1099 = vmatprep.subr.mxu0 0.0
    %1100 = vmatpush1.msra.mxu0 0.0
    %1101 = vmatprep.subr.mxu0 0.0
    %1102 = vmatpush1.msra.mxu0 0.0
    %1103 = vmatprep.subr.mxu0 0.0
    %1104 = vmatpush1.msra.mxu0 0.0
    %1105 = vmatprep.subr.mxu0 0.0
    %1106 = vmatpush1.msra.mxu0 0.0
    %1107 = vmatprep.subr.mxu0 0.0
    %1108 = vmatpush1.msra.mxu0 0.0
    %1109 = vmatprep.subr.mxu0 0.0
    %1110 = vmatpush1.msra.mxu0 0.0
    %1111 = vmatprep.subr.mxu0 0.0
    %1112 = vmatpush1.msra.mxu0 0.0
    %1113 = vmatprep.subr.mxu0 0.0
    %1114 = vmatpush1.msra.mxu0 0.0
    %1115 = vmatprep.subr.mxu0 0.0
    %1116 = vmatpush1.msra.mxu0 0.0
    %1117 = vmatprep.subr.mxu0 0.0
    %1118 = vmatpush1.msra.mxu0 0.0
    %1119 = vmatprep.mubr.f32.mxu0 0.0
    %1120 = vmatmul.mubr.f32.gmra.mrb[0].mxu0 %v423
    %v1121 = vpop.f32.mrb[0].mxu0
    %v1122 = vadd.f32 %v1052, %v1121
    %v1123 = vpop.f32.mrb[0].mxu0
    %1124 = vdwg.mxu0
    %v1125 = vmax.f32 %v1122, 0.0
    %v1126 = vld [vmem:[%s3] sm:$0xff]
    %v1127 = vld [vmem:[%s3 + $0x8] sm:$0xff]
    %v1128 = vld [vmem:[%s3 + $0x10] sm:$0xff]
    %v1129 = vld [vmem:[%s3 + $0x18] sm:$0xff]
    %v1130 = vld [vmem:[%s3 + $0x20] sm:$0xff]
    %v1131 = vld [vmem:[%s3 + $0x28] sm:$0xff]
    %v1132 = vld [vmem:[%s3 + $0x30] sm:$0xff]
    %v1133 = vld [vmem:[%s3 + $0x38] sm:$0xff]
    %v1134 = vld [vmem:[%s3 + $0x40] sm:$0xff]
    %v1135 = vld [vmem:[%s3 + $0x48] sm:$0xff]
    %v1136 = vld [vmem:[%s3 + $0x50] sm:$0xff]
    %v1137 = vld [vmem:[%s3 + $0x58] sm:$0xff]
    %v1138 = vld [vmem:[%s3 + $0x60] sm:$0xff]
    %v1139 = vld [vmem:[%s3 + $0x68] sm:$0xff]
    %v1140 = vld [vmem:[%s3 + $0x70] sm:$0xff]
    %v1141 = vld [vmem:[%s3 + $0x78] sm:$0xff]
    %v1142 = vld [vmem:[#allocation8] sm:$0x1]
    %v1144 = vlaneseq
    %v1145 = vshrl.u32 %v1144, 7
    %v1146 = vsub.s32 0, %v1145
    %v1147 = vrot.slane %v1142, %v1146
    %1149 = vmatprep.subr.mxu0 0.0
    %1150 = vmatpush1.msra.mxu0 %v1126
    %1151 = vmatprep.subr.mxu0 0.0
    %1152 = vmatpush1.msra.mxu0 %v1127
    %1153 = vmatprep.subr.mxu0 0.0
    %1154 = vmatpush1.msra.mxu0 %v1128
    %1155 = vmatprep.subr.mxu0 0.0
    %1156 = vmatpush1.msra.mxu0 %v1129
    %1157 = vmatprep.subr.mxu0 0.0
    %1158 = vmatpush1.msra.mxu0 %v1130
    %1159 = vmatprep.subr.mxu0 0.0
    %1160 = vmatpush1.msra.mxu0 %v1131
    %1161 = vmatprep.subr.mxu0 0.0
    %1162 = vmatpush1.msra.mxu0 %v1132
    %1163 = vmatprep.subr.mxu0 0.0
    %1164 = vmatpush1.msra.mxu0 %v1133
    %1165 = vmatprep.subr.mxu0 0.0
    %1166 = vmatpush1.msra.mxu0 %v1134
    %1167 = vmatprep.subr.mxu0 0.0
    %1168 = vmatpush1.msra.mxu0 %v1135
    %1169 = vmatprep.subr.mxu0 0.0
    %1170 = vmatpush1.msra.mxu0 %v1136
    %1171 = vmatprep.subr.mxu0 0.0
    %1172 = vmatpush1.msra.mxu0 %v1137
    %1173 = vmatprep.subr.mxu0 0.0
    %1174 = vmatpush1.msra.mxu0 %v1138
    %1175 = vmatprep.subr.mxu0 0.0
    %1176 = vmatpush1.msra.mxu0 %v1139
    %1177 = vmatprep.subr.mxu0 0.0
    %1178 = vmatpush1.msra.mxu0 %v1140
    %1179 = vmatprep.subr.mxu0 0.0
    %1180 = vmatpush1.msra.mxu0 %v1141
    %1181 = vmatprep.subr.mxu0 0.0
    %1182 = vmatpush1.msra.mxu0 0.0
    %1183 = vmatprep.subr.mxu0 0.0
    %1184 = vmatpush1.msra.mxu0 0.0
    %1185 = vmatprep.subr.mxu0 0.0
    %1186 = vmatpush1.msra.mxu0 0.0
    %1187 = vmatprep.subr.mxu0 0.0
    %1188 = vmatpush1.msra.mxu0 0.0
    %1189 = vmatprep.subr.mxu0 0.0
    %1190 = vmatpush1.msra.mxu0 0.0
    %1191 = vmatprep.subr.mxu0 0.0
    %1192 = vmatpush1.msra.mxu0 0.0
    %1193 = vmatprep.subr.mxu0 0.0
    %1194 = vmatpush1.msra.mxu0 0.0
    %1195 = vmatprep.subr.mxu0 0.0
    %1196 = vmatpush1.msra.mxu0 0.0
    %1197 = vmatprep.subr.mxu0 0.0
    %1198 = vmatpush1.msra.mxu0 0.0
    %1199 = vmatprep.subr.mxu0 0.0
    %1200 = vmatpush1.msra.mxu0 0.0
    %1201 = vmatprep.subr.mxu0 0.0
    %1202 = vmatpush1.msra.mxu0 0.0
    %1203 = vmatprep.subr.mxu0 0.0
    %1204 = vmatpush1.msra.mxu0 0.0
    %1205 = vmatprep.subr.mxu0 0.0
    %1206 = vmatpush1.msra.mxu0 0.0
    %1207 = vmatprep.subr.mxu0 0.0
    %1208 = vmatpush1.msra.mxu0 0.0
    %1209 = vmatprep.subr.mxu0 0.0
    %1210 = vmatpush1.msra.mxu0 0.0
    %1211 = vmatprep.subr.mxu0 0.0
    %1212 = vmatpush1.msra.mxu0 0.0
    %1213 = vmatprep.mubr.f32.mxu0 0.0
    %1214 = vmatmul.mubr.f32.gmra.mrb[0].mxu0 %v1125
    %v1215 = vpop.f32.mrb[0].mxu0
    %v1216 = vadd.f32 %v1147, %v1215
    %v1217 = vpop.f32.mrb[0].mxu0
    %1218 = vdwg.mxu0
    %v1219 = vmax.f32 %v1216, 0.0
    %v1220 = vld [vmem:[#allocation10] sm:$0xff]
    %v1221 = vld [vmem:[#allocation10 + $0x8] sm:$0xff]
    %v1222 = vld [vmem:[#allocation10 + $0x10] sm:$0xff]
    %v1223 = vld [vmem:[#allocation10 + $0x18] sm:$0xff]
    %v1224 = vld [vmem:[#allocation11] sm:$0x1]
    %v1226 = vlaneseq
    %v1227 = vshrl.u32 %v1226, 7
    %v1228 = vsub.s32 0, %v1227
    %v1229 = vrot.slane %v1224, %v1228
    %vm1231 = vcmask 261120
    %v1233 = vsel %vm1231, %v1219, 0
    %1235 = vmatprep.subr.mxu0 0.0
    %1236 = vmatpush1.msra.mxu0 %v1220
    %1237 = vmatprep.subr.mxu0 0.0
    %1238 = vmatpush1.msra.mxu0 %v1221
    %1239 = vmatprep.subr.mxu0 0.0
    %1240 = vmatpush1.msra.mxu0 %v1222
    %1241 = vmatprep.subr.mxu0 0.0
    %1242 = vmatpush1.msra.mxu0 %v1223
    %1243 = vmatprep.subr.mxu0 0.0
    %1244 = vmatpush1.msra.mxu0 0.0
    %1245 = vmatprep.subr.mxu0 0.0
    %1246 = vmatpush1.msra.mxu0 0.0
    %1247 = vmatprep.subr.mxu0 0.0
    %1248 = vmatpush1.msra.mxu0 0.0
    %1249 = vmatprep.subr.mxu0 0.0
    %1250 = vmatpush1.msra.mxu0 0.0
    %1251 = vmatprep.subr.mxu0 0.0
    %1252 = vmatpush1.msra.mxu0 0.0
    %1253 = vmatprep.subr.mxu0 0.0
    %1254 = vmatpush1.msra.mxu0 0.0
    %1255 = vmatprep.subr.mxu0 0.0
    %1256 = vmatpush1.msra.mxu0 0.0
    %1257 = vmatprep.subr.mxu0 0.0
    %1258 = vmatpush1.msra.mxu0 0.0
    %1259 = vmatprep.subr.mxu0 0.0
    %1260 = vmatpush1.msra.mxu0 0.0
    %1261 = vmatprep.subr.mxu0 0.0
    %1262 = vmatpush1.msra.mxu0 0.0
    %1263 = vmatprep.subr.mxu0 0.0
    %1264 = vmatpush1.msra.mxu0 0.0
    %1265 = vmatprep.subr.mxu0 0.0
    %1266 = vmatpush1.msra.mxu0 0.0
    %1267 = vmatprep.subr.mxu0 0.0
    %1268 = vmatpush1.msra.mxu0 0.0
    %1269 = vmatprep.subr.mxu0 0.0
    %1270 = vmatpush1.msra.mxu0 0.0
    %1271 = vmatprep.subr.mxu0 0.0
    %1272 = vmatpush1.msra.mxu0 0.0
    %1273 = vmatprep.subr.mxu0 0.0
    %1274 = vmatpush1.msra.mxu0 0.0
    %1275 = vmatprep.subr.mxu0 0.0
    %1276 = vmatpush1.msra.mxu0 0.0
    %1277 = vmatprep.subr.mxu0 0.0
    %1278 = vmatpush1.msra.mxu0 0.0
    %1279 = vmatprep.subr.mxu0 0.0
    %1280 = vmatpush1.msra.mxu0 0.0
    %1281 = vmatprep.subr.mxu0 0.0
    %1282 = vmatpush1.msra.mxu0 0.0
    %1283 = vmatprep.subr.mxu0 0.0
    %1284 = vmatpush1.msra.mxu0 0.0
    %1285 = vmatprep.subr.mxu0 0.0
    %1286 = vmatpush1.msra.mxu0 0.0
    %1287 = vmatprep.subr.mxu0 0.0
    %1288 = vmatpush1.msra.mxu0 0.0
    %1289 = vmatprep.subr.mxu0 0.0
    %1290 = vmatpush1.msra.mxu0 0.0
    %1291 = vmatprep.subr.mxu0 0.0
    %1292 = vmatpush1.msra.mxu0 0.0
    %1293 = vmatprep.subr.mxu0 0.0
    %1294 = vmatpush1.msra.mxu0 0.0
    %1295 = vmatprep.subr.mxu0 0.0
    %1296 = vmatpush1.msra.mxu0 0.0
    %1297 = vmatprep.subr.mxu0 0.0
    %1298 = vmatpush1.msra.mxu0 0.0
    %1299 = vmatprep.mubr.f32.mxu0 0.0
    %1300 = vmatmul.mubr.f32.gmra.mrb[0].mxu0 %v1233
    %v1301 = vpop.f32.mrb[0].mxu0
    %v1302 = vadd.f32 %v1229, %v1301
    %v1303 = vpop.f32.mrb[0].mxu0
    %1304 = vdwg.mxu0
    %1305 = vst [vmem:[#allocation13] sm:$0xff] %v1302
    // Predicated region
    $region54: #{tpu_custom_call.1} parent=1 // pred_check
      _
    $region55: #{tpu_custom_call.1} parent=1 // pred_check_branch
      %1307 = sbr.rel (0) target = $region57
    $region56: #{tpu_custom_call.1} parent=1 // pred_region
      %s1309 = ssub.s32 128, 128
      %1310 = vsyncadd [#allocation4], %s1309
      %s1312 = sshll.u32 [#allocation13], 4
      %s1313 = int_to_ptr.vmem [resolvable:$true] %s1312
      %1315 = dma.vmem_to_hbm [thread:$0]  %s1313, 128, %s7, [#allocation4]
    $region57: #{tpu_custom_call.1} parent=1 // pred_fallthru
      _
    // Predicated region
    $region58: #{tpu_custom_call.1} parent=1 // pred_check
      _
    $region59: #{tpu_custom_call.1} parent=1 // pred_check_branch
      %1317 = sbr.rel (0) target = $region61
    $region60: #{tpu_custom_call.1} parent=1 // pred_region
      %1318 = dma.done [#allocation4], 128
    $region61: #{tpu_custom_call.1} parent=1 // pred_fallthru
      _
    %1319 = vsyncpa [#allocation3], 1
    %1320 = vsyncpa [#allocation6], 1
    %1321 = vsyncpa [#allocation9], 1
    %1322 = vsyncpa [#allocation12], 1
    %1323 = vsyncpa [#allocation4], 1

</llo_original>
